<compile_context>
chip_gen: v7x
topology: tpu7x:2x2x1
jax: 0.10.0
libtpu: 0.0.40
codegen_flags: <defaults>
</compile_context>

<pallas_src>
import functools

import jax
import jax.numpy as jnp
from jax.experimental import pallas as pl
from jax.experimental.pallas import tpu as pltpu


def _vmem_block_bytes(c, k, t):
    """Double-buffered VMEM bytes for one grid step: x(f32)+raw(bf16)+y(f32)
    blocks plus the weight / per-channel constant operands (lane-padded)."""
    per_step = t * (c * 4 + k * 2 + k * 4)
    consts = k * c * 4 + 5 * k * 128 * 4
    return 2 * (per_step + consts)


def _pick_tile_cols(s, c, k, bs, max_block_bytes=12 * 1024 * 1024):
    """Spatial tile width T: a multiple of 128 dividing S (or S itself), chosen
    so the double-buffered blocks stay within `max_block_bytes`."""
    bytes_per_col = 2 * (c * 4 + k * 6)
    max_cols = max(128, max_block_bytes // max(bytes_per_col, 1))
    if s <= max_cols:
        t = s
    else:
        t = 0
        cand = (max_cols // 128) * 128
        while cand >= 128:
            if s % cand == 0:
                t = cand
                break
            cand -= 128
        if t == 0:
            # TODO(synk): add a padded/masked partial-tile path instead of this
            # whole-level fallback for awkward S (budget is asserted below).
            t = s
    # Keep >=2 grid steps so both TensorCores get work on v7x (megacore grid).
    if bs * (s // t) < 2 and t == s and s % 256 == 0:
        t = s // 2
    return t


def _detect_kernel(x_ref, w_ref, b_ref, ca_ref, cb_ref, sx_ref, sy_ref,
                   raw_ref, y_ref, *, nx, stride, tile_cols):
    """One (batch, spatial-tile) grid step; everything is lane-dense over T.

    x_ref:   (1, C, T)  f32 activations (NCHW order, T spatial positions on lanes)
    w_ref:   (K, C)     f32 fused 1x1-conv weight, K = na*no
    b_ref:   (K, 1)     f32 conv bias
    ca_ref:  (K, 1)     f32 coefficient of sigmoid      (2*stride / 0 / 1)
    cb_ref:  (K, 1)     f32 coefficient of sigmoid^2    (4*anchor_wh / 0)
    sx_ref:  (K, 1)     f32 1.0 on x-offset channels (k%no==0), else 0
    sy_ref:  (K, 1)     f32 1.0 on y-offset channels (k%no==1), else 0
    raw_ref: (1, K, T)  bf16 pre-sigmoid conv output (PyTorch "x[i]", NCHW order)
    y_ref:   (1, K, T)  f32 decoded boxes / scores (NCHW order)
    """
    t = pl.program_id(1)

    # Fused 1x1 conv over all anchors: (K, C) @ (C, T) on the MXU, f32 accum.
    logits = jnp.dot(w_ref[...], x_ref[0],
                     preferred_element_type=jnp.float32) + b_ref[...]
    raw_ref[0] = logits.astype(raw_ref.dtype)
    s = jax.nn.sigmoid(logits)                                     # EUP slot

    # Spatial coordinates of the lanes in this tile: flat index j = gy*nx + gx.
    # Integer divide via float reciprocal; exact while ny*nx < ~1e6 (asserted
    # by the wrapper), since the f32 error ~3 ulp * ny stays below 0.5/nx.
    col = jax.lax.broadcasted_iota(jnp.int32, (1, tile_cols), 1)
    j = (t * tile_cols + col).astype(jnp.float32)
    gy = jnp.floor((j + 0.5) * (1.0 / nx))
    gx = j - gy * nx

    # Box decode (Horner): y = s*(ca + cb*s) + grid offset on the xy channels.
    g = sx_ref[...] * ((gx - 0.5) * stride) + sy_ref[...] * ((gy - 0.5) * stride)
    y_ref[0] = s * (ca_ref[...] + cb_ref[...] * s) + g


def detect_layer(x_nchw, w_kc, bias, anchors_i, stride):
    """One detection level.

    x_nchw:    (bs, C, ny, nx) float32
    w_kc:      (K, C) float32, K = na*no (Conv2d 1x1 weight with the 1x1 squeezed)
    bias:      (K,) float32
    anchors_i: (na, 2) float32
    stride:    python float
    Returns (raw, z_i):
      raw: (bs, na, ny, nx, no)  -- conv output, permuted, pre-sigmoid (f32)
      z_i: (bs, na*ny*nx, no)    -- decoded boxes/scores (f32)
    """
    bs, C, ny, nx = (int(d) for d in x_nchw.shape)
    na = int(anchors_i.shape[0])
    K = int(w_kc.shape[0])
    no = K // na
    S = ny * nx
    assert S <= 1_000_000, "float-reciprocal gy/gx trick requires ny*nx < ~1e6"

    T = _pick_tile_cols(S, C, K, bs)
    nt = S // T
    vmem_need = _vmem_block_bytes(C, K, T)
    assert vmem_need <= (48 << 20), (
        f"Detect tile does not fit the VMEM budget (S={S}, C={C}, K={K}, T={T})")
    vmem_limit = int(min(vmem_need + (8 << 20), 56 << 20))

    # NCHW -> (bs, C, S): a pure reshape (no transpose, no extra HBM pass).
    x_cs = x_nchw.reshape(bs, C, S).astype(jnp.float32)

    # Per-output-channel decode constants (tiny; constant index_map -> one DMA).
    k_idx = jnp.arange(K, dtype=jnp.int32)
    c_in_no = k_idx % no
    a_idx = k_idx // no
    ca = jnp.where(c_in_no < 2, 2.0 * stride,
                   jnp.where(c_in_no < 4, 0.0, 1.0)).astype(jnp.float32)
    cb = jnp.where(c_in_no == 2, 4.0 * anchors_i[a_idx, 0],
                   jnp.where(c_in_no == 3, 4.0 * anchors_i[a_idx, 1], 0.0)
                   ).astype(jnp.float32)
    sx = (c_in_no == 0).astype(jnp.float32)
    sy = (c_in_no == 1).astype(jnp.float32)
    b2 = bias.astype(jnp.float32).reshape(K, 1)
    ca, cb, sx, sy = (v.reshape(K, 1) for v in (ca, cb, sx, sy))

    kernel = functools.partial(_detect_kernel, nx=nx, stride=float(stride),
                               tile_cols=T)

    raw, y = pl.pallas_call(
        kernel,
        out_shape=(jax.ShapeDtypeStruct((bs, K, S), jnp.bfloat16),
                   jax.ShapeDtypeStruct((bs, K, S), jnp.float32)),
        grid=(bs, nt),
        in_specs=[
            pl.BlockSpec((1, C, T), lambda b, t: (b, 0, t)),   # activations
            pl.BlockSpec((K, C), lambda b, t: (0, 0)),         # fused conv weight
            pl.BlockSpec((K, 1), lambda b, t: (0, 0)),         # bias
            pl.BlockSpec((K, 1), lambda b, t: (0, 0)),         # coef of s
            pl.BlockSpec((K, 1), lambda b, t: (0, 0)),         # coef of s^2
            pl.BlockSpec((K, 1), lambda b, t: (0, 0)),         # x-channel select
            pl.BlockSpec((K, 1), lambda b, t: (0, 0)),         # y-channel select
        ],
        out_specs=(pl.BlockSpec((1, K, T), lambda b, t: (b, 0, t)),
                   pl.BlockSpec((1, K, T), lambda b, t: (b, 0, t))),
        compiler_params=pltpu.CompilerParams(
            dimension_semantics=("parallel", "parallel"),
            vmem_limit_bytes=vmem_limit),
    )(x_cs, w_kc.astype(jnp.float32), b2, ca, cb, sx, sy)

    # Anchor-major reorder to PyTorch's output layout (cheap post-kernel passes
    # on the small outputs; keeps all in-kernel stores lane-dense).
    raw5 = (raw.reshape(bs, na, no, ny, nx)
               .transpose(0, 1, 3, 4, 2)
               .astype(jnp.float32))                        # (bs, na, ny, nx, no)
    z_i = (y.reshape(bs, na, no, S)
             .transpose(0, 1, 3, 2)
             .reshape(bs, na * S, no))                      # (bs, na*S, no)
    return raw5, z_i


def detect_forward(xs, weights, biases, anchors, strides):
    """Full Detect.forward (eval mode): returns (cat(z, 1), [x_i permuted])."""
    # TODO(synk): fuse the three levels into a single pallas_call via
    # PrefetchScalarGridSpec (per-tile level id selecting stride/coeffs and
    # channel-padded weights) to remove two launch/warm-up phases.
    z, raws = [], []
    for i, x in enumerate(xs):
        raw, zi = detect_layer(x, weights[i], biases[i], anchors[i], strides[i])
        raws.append(raw)
        z.append(zi)
    return jnp.concatenate(z, axis=1), raws


def _reference_forward(xs, weights, biases, anchors, strides, na, no):
    """Pure-JAX f32 reference (mirrors PyTorch semantics) for correctness check."""
    z, raws = [], []
    for i, x in enumerate(xs):
        bs, C, ny, nx = x.shape
        out = (jnp.einsum("kc,bchw->bkhw", weights[i], x)
               + biases[i][None, :, None, None])
        out = out.reshape(bs, na, no, ny, nx).transpose(0, 1, 3, 4, 2)
        raws.append(out)
        y = jax.nn.sigmoid(out)
        gy_, gx_ = jnp.meshgrid(jnp.arange(ny, dtype=jnp.float32),
                                jnp.arange(nx, dtype=jnp.float32), indexing="ij")
        grid = jnp.stack((gx_, gy_), axis=-1).reshape(1, 1, ny, nx, 2)
        anchor_grid = anchors[i].reshape(1, na, 1, 1, 2)
        xy = (y[..., 0:2] * 2.0 - 0.5 + grid) * strides[i]
        wh = (y[..., 2:4] * 2.0) ** 2 * anchor_grid
        y = jnp.concatenate([xy, wh, y[..., 4:]], axis=-1)
        z.append(y.reshape(bs, -1, no))
    return jnp.concatenate(z, axis=1), raws


if __name__ == "__main__":
    key = jax.random.PRNGKey(0)

    # Small, Detect-consistent configuration.
    nc = 3                       # classes
    no = nc + 5                  # outputs per anchor
    anchors_cfg = [[10., 13., 16., 30., 33., 23.],
                   [30., 61., 62., 45., 59., 119.],
                   [116., 90., 156., 198., 373., 326.]]
    nl = len(anchors_cfg)
    na = len(anchors_cfg[0]) // 2
    K = na * no
    ch = (16, 32, 64)
    strides = [8.0, 16.0, 32.0]
    bs = 2
    spatial = [(32, 32), (16, 16), (8, 8)]   # level 0 exercises the large-tile path

    anchors = jnp.asarray(anchors_cfg, dtype=jnp.float32).reshape(nl, na, 2)

    keys = jax.random.split(key, 3 * nl)
    weights, biases, xs = [], [], []
    for i in range(nl):
        w = jax.random.normal(keys[3 * i], (K, ch[i]), dtype=jnp.float32) * 0.05
        b = jax.random.normal(keys[3 * i + 1], (K,), dtype=jnp.float32) * 0.05
        ny, nx = spatial[i]
        x = jax.random.normal(keys[3 * i + 2], (bs, ch[i], ny, nx), dtype=jnp.float32)
        weights.append(w)
        biases.append(b)
        xs.append(x)

    z_cat, raw_list = detect_forward(xs, weights, biases, anchors, strides)
    z_cat = jax.block_until_ready(z_cat)
    raw_list = [jax.block_until_ready(r) for r in raw_list]

    # Lightweight correctness check against the pure-JAX reference.
    z_ref, raw_ref = _reference_forward(xs, weights, biases, anchors, strides, na, no)
    assert z_cat.shape == (bs, sum(na * h * w for (h, w) in spatial), no)
    for r, rr in zip(raw_list, raw_ref):
        assert r.shape == rr.shape
        assert jnp.allclose(r, rr, rtol=5e-2, atol=5e-2), "raw mismatch"
    assert jnp.allclose(z_cat, z_ref, rtol=5e-2, atol=5e-2), "z mismatch"

    print("KERNEL_OK")
</pallas_src>

<mosaic_0001>
module attributes {stable_mosaic.version = 11 : i64} {
  func.func @_detect_kernel(%arg0: i32, %arg1: i32, %arg2: memref<1x16x1024xf32, #tpu.memory_space<vmem>>, %arg3: memref<24x16xf32, #tpu.memory_space<vmem>>, %arg4: memref<24x1xf32, #tpu.memory_space<vmem>>, %arg5: memref<24x1xf32, #tpu.memory_space<vmem>>, %arg6: memref<24x1xf32, #tpu.memory_space<vmem>>, %arg7: memref<24x1xf32, #tpu.memory_space<vmem>>, %arg8: memref<24x1xf32, #tpu.memory_space<vmem>>, %arg9: memref<1x24x1024xbf16, #tpu.memory_space<vmem>>, %arg10: memref<1x24x1024xf32, #tpu.memory_space<vmem>>) attributes {dimension_semantics = [#tpu.dimension_semantics<parallel>, #tpu.dimension_semantics<parallel>], iteration_bounds = array<i64: 2, 1>, scalar_prefetch = 0 : i64, scratch_operands = 0 : i64, tpu.core_type = #tpu.core_type<tc>, window_params = [{transform_indices = @transform_0, window_bounds = array<i64: 1, 16, 1024>}, {pipeline_mode = #tpu.pipeline_mode<synchronous>, transform_indices = @transform_1, window_bounds = array<i64: 24, 16>}, {pipeline_mode = #tpu.pipeline_mode<synchronous>, transform_indices = @transform_2, window_bounds = array<i64: 24, 1>}, {pipeline_mode = #tpu.pipeline_mode<synchronous>, transform_indices = @transform_3, window_bounds = array<i64: 24, 1>}, {pipeline_mode = #tpu.pipeline_mode<synchronous>, transform_indices = @transform_4, window_bounds = array<i64: 24, 1>}, {pipeline_mode = #tpu.pipeline_mode<synchronous>, transform_indices = @transform_5, window_bounds = array<i64: 24, 1>}, {pipeline_mode = #tpu.pipeline_mode<synchronous>, transform_indices = @transform_6, window_bounds = array<i64: 24, 1>}, {transform_indices = @transform_7, window_bounds = array<i64: 1, 24, 1024>}, {transform_indices = @transform_8, window_bounds = array<i64: 1, 24, 1024>}]} {
    %c0 = arith.constant 0 : index
    %c0_0 = arith.constant 0 : index
    %0 = vector.load %arg3[%c0, %c0_0] : memref<24x16xf32, #tpu.memory_space<vmem>>, vector<24x16xf32>
    %c0_1 = arith.constant 0 : index
    %c0_2 = arith.constant 0 : index
    %c0_3 = arith.constant 0 : index
    %1 = vector.load %arg2[%c0_1, %c0_2, %c0_3] : memref<1x16x1024xf32, #tpu.memory_space<vmem>>, vector<1x16x1024xf32>
    %2 = vector.shape_cast %1 : vector<1x16x1024xf32> to vector<16x1024xf32>
    %cst = arith.constant dense<0.000000e+00> : vector<24x1024xf32>
    %3 = tpu.matmul %0, %2, %cst {dimension_numbers = #tpu.dot_dimension_numbers<[1], [0], [0], [1], [0, 0, 1, 1], [], []>} : vector<24x16xf32>, vector<16x1024xf32>, vector<24x1024xf32> -> vector<24x1024xf32>
    %c0_4 = arith.constant 0 : index
    %c0_5 = arith.constant 0 : index
    %4 = vector.load %arg4[%c0_4, %c0_5] : memref<24x1xf32, #tpu.memory_space<vmem>>, vector<24x1xf32>
    %5 = vector.broadcast %4 : vector<24x1xf32> to vector<24x1024xf32>
    %6 = arith.addf %3, %5 : vector<24x1024xf32>
    %7 = arith.truncf %6 : vector<24x1024xf32> to vector<24x1024xbf16>
    %c0_6 = arith.constant 0 : index
    %c0_7 = arith.constant 0 : index
    %c0_8 = arith.constant 0 : index
    %8 = vector.load %arg9[%c0_6, %c0_7, %c0_8] : memref<1x24x1024xbf16, #tpu.memory_space<vmem>>, vector<1x24x1024xbf16>
    %9 = vector.shape_cast %8 : vector<1x24x1024xbf16> to vector<24x1024xbf16>
    %10 = vector.shape_cast %7 : vector<24x1024xbf16> to vector<1x24x1024xbf16>
    tpu.vector_store %arg9[%c0_6, %c0_7, %c0_8], %10 {strides = array<i32>} : memref<1x24x1024xbf16, #tpu.memory_space<vmem>>, vector<1x24x1024xbf16>,
    %11 = arith.negf %6 : vector<24x1024xf32>
    %12 = math.exp %11 : vector<24x1024xf32>
    %cst_9 = arith.constant 1.000000e+00 : f32
    %13 = vector.broadcast %cst_9 : f32 to vector<24x1024xf32>
    %14 = arith.addf %13, %12 : vector<24x1024xf32>
    %15 = arith.divf %13, %14 : vector<24x1024xf32>
    %16 = tpu.iota {dimensions = array<i32: 1>} : vector<1x1024xi32>
    %c1024_i32 = arith.constant 1024 : i32
    %17 = arith.muli %arg1, %c1024_i32 : i32
    %18 = vector.broadcast %17 : i32 to vector<1x1024xi32>
    %19 = arith.addi %18, %16 : vector<1x1024xi32>
    %20 = arith.sitofp %19 : vector<1x1024xi32> to vector<1x1024xf32>
    %cst_10 = arith.constant 5.000000e-01 : f32
    %21 = vector.broadcast %cst_10 : f32 to vector<1x1024xf32>
    %22 = arith.addf %20, %21 : vector<1x1024xf32>
    %cst_11 = arith.constant 3.125000e-02 : f32
    %23 = vector.broadcast %cst_11 : f32 to vector<1x1024xf32>
    %24 = arith.mulf %22, %23 : vector<1x1024xf32>
    %25 = math.floor %24 : vector<1x1024xf32>
    %cst_12 = arith.constant 3.200000e+01 : f32
    %26 = vector.broadcast %cst_12 : f32 to vector<1x1024xf32>
    %27 = arith.mulf %25, %26 : vector<1x1024xf32>
    %28 = arith.subf %20, %27 : vector<1x1024xf32>
    %c0_13 = arith.constant 0 : index
    %c0_14 = arith.constant 0 : index
    %29 = vector.load %arg7[%c0_13, %c0_14] : memref<24x1xf32, #tpu.memory_space<vmem>>, vector<24x1xf32>
    %cst_15 = arith.constant 5.000000e-01 : f32
    %30 = vector.broadcast %cst_15 : f32 to vector<1x1024xf32>
    %31 = arith.subf %28, %30 : vector<1x1024xf32>
    %cst_16 = arith.constant 8.000000e+00 : f32
    %32 = vector.broadcast %cst_16 : f32 to vector<1x1024xf32>
    %33 = arith.mulf %31, %32 : vector<1x1024xf32>
    %34 = vector.broadcast %29 : vector<24x1xf32> to vector<24x1024xf32>
    %35 = vector.broadcast %33 : vector<1x1024xf32> to vector<24x1024xf32>
    %36 = arith.mulf %34, %35 : vector<24x1024xf32>
    %c0_17 = arith.constant 0 : index
    %c0_18 = arith.constant 0 : index
    %37 = vector.load %arg8[%c0_17, %c0_18] : memref<24x1xf32, #tpu.memory_space<vmem>>, vector<24x1xf32>
    %cst_19 = arith.constant 5.000000e-01 : f32
    %38 = vector.broadcast %cst_19 : f32 to vector<1x1024xf32>
    %39 = arith.subf %25, %38 : vector<1x1024xf32>
    %cst_20 = arith.constant 8.000000e+00 : f32
    %40 = vector.broadcast %cst_20 : f32 to vector<1x1024xf32>
    %41 = arith.mulf %39, %40 : vector<1x1024xf32>
    %42 = vector.broadcast %37 : vector<24x1xf32> to vector<24x1024xf32>
    %43 = vector.broadcast %41 : vector<1x1024xf32> to vector<24x1024xf32>
    %44 = arith.mulf %42, %43 : vector<24x1024xf32>
    %45 = arith.addf %36, %44 : vector<24x1024xf32>
    %c0_21 = arith.constant 0 : index
    %c0_22 = arith.constant 0 : index
    %46 = vector.load %arg5[%c0_21, %c0_22] : memref<24x1xf32, #tpu.memory_space<vmem>>, vector<24x1xf32>
    %c0_23 = arith.constant 0 : index
    %c0_24 = arith.constant 0 : index
    %47 = vector.load %arg6[%c0_23, %c0_24] : memref<24x1xf32, #tpu.memory_space<vmem>>, vector<24x1xf32>
    %48 = vector.broadcast %47 : vector<24x1xf32> to vector<24x1024xf32>
    %49 = arith.mulf %48, %15 : vector<24x1024xf32>
    %50 = vector.broadcast %46 : vector<24x1xf32> to vector<24x1024xf32>
    %51 = arith.addf %50, %49 : vector<24x1024xf32>
    %52 = arith.mulf %15, %51 : vector<24x1024xf32>
    %53 = arith.addf %52, %45 : vector<24x1024xf32>
    %c0_25 = arith.constant 0 : index
    %c0_26 = arith.constant 0 : index
    %c0_27 = arith.constant 0 : index
    %54 = vector.load %arg10[%c0_25, %c0_26, %c0_27] : memref<1x24x1024xf32, #tpu.memory_space<vmem>>, vector<1x24x1024xf32>
    %55 = vector.shape_cast %54 : vector<1x24x1024xf32> to vector<24x1024xf32>
    %56 = vector.shape_cast %53 : vector<24x1024xf32> to vector<1x24x1024xf32>
    tpu.vector_store %arg10[%c0_25, %c0_26, %c0_27], %56 {strides = array<i32>} : memref<1x24x1024xf32, #tpu.memory_space<vmem>>, vector<1x24x1024xf32>,
    return
  }
  func.func @transform_0(%arg0: i32, %arg1: i32) -> (i32, i32, i32) {
    %c0_i32 = arith.constant 0 : i32
    %c0_i32_0 = arith.constant 0 : i32
    return %arg0, %c0_i32, %arg1 : i32, i32, i32
  }
  func.func @transform_1(%arg0: i32, %arg1: i32) -> (i32, i32) {
    %c0_i32 = arith.constant 0 : i32
    %c0_i32_0 = arith.constant 0 : i32
    %c0_i32_1 = arith.constant 0 : i32
    return %c0_i32, %c0_i32_0 : i32, i32
  }
  func.func @transform_2(%arg0: i32, %arg1: i32) -> (i32, i32) {
    %c0_i32 = arith.constant 0 : i32
    %c0_i32_0 = arith.constant 0 : i32
    %c0_i32_1 = arith.constant 0 : i32
    return %c0_i32, %c0_i32_0 : i32, i32
  }
  func.func @transform_3(%arg0: i32, %arg1: i32) -> (i32, i32) {
    %c0_i32 = arith.constant 0 : i32
    %c0_i32_0 = arith.constant 0 : i32
    %c0_i32_1 = arith.constant 0 : i32
    return %c0_i32, %c0_i32_0 : i32, i32
  }
  func.func @transform_4(%arg0: i32, %arg1: i32) -> (i32, i32) {
    %c0_i32 = arith.constant 0 : i32
    %c0_i32_0 = arith.constant 0 : i32
    %c0_i32_1 = arith.constant 0 : i32
    return %c0_i32, %c0_i32_0 : i32, i32
  }
  func.func @transform_5(%arg0: i32, %arg1: i32) -> (i32, i32) {
    %c0_i32 = arith.constant 0 : i32
    %c0_i32_0 = arith.constant 0 : i32
    %c0_i32_1 = arith.constant 0 : i32
    return %c0_i32, %c0_i32_0 : i32, i32
  }
  func.func @transform_6(%arg0: i32, %arg1: i32) -> (i32, i32) {
    %c0_i32 = arith.constant 0 : i32
    %c0_i32_0 = arith.constant 0 : i32
    %c0_i32_1 = arith.constant 0 : i32
    return %c0_i32, %c0_i32_0 : i32, i32
  }
  func.func @transform_7(%arg0: i32, %arg1: i32) -> (i32, i32, i32) {
    %c0_i32 = arith.constant 0 : i32
    %c0_i32_0 = arith.constant 0 : i32
    return %arg0, %c0_i32, %arg1 : i32, i32, i32
  }
  func.func @transform_8(%arg0: i32, %arg1: i32) -> (i32, i32, i32) {
    %c0_i32 = arith.constant 0 : i32
    %c0_i32_0 = arith.constant 0 : i32
    return %arg0, %c0_i32, %arg1 : i32, i32, i32
  }
}

</mosaic_0001>

<llo_original>
// kernel: tpu_custom_call.1
$region0: #{tpu_custom_call.1}
  #allocation0 [shape = 'u32[]', space=smem, size = 0x4, offset = 0x4, fixed_abs, tag = 'smem constant byte address 0x4 - core index']
  #allocation1 [shape = 'u32[144,128]{1,0:T(1,128)}', space=vmem, size = 0x12000, scoped, tag = 'internal scratch']
  %s0 = inlined_call_operand.hbm [shape: f32[2,16,1024], index: 0, kind: input, shape index: {}]
  %s1 = inlined_call_operand.vmem [shape: f32[24,16], index: 1, kind: input, shape index: {}]
  %s2 = inlined_call_operand.vmem [shape: f32[24,1], index: 2, kind: input, shape index: {}]
  %s3 = inlined_call_operand.vmem [shape: f32[24,1], index: 3, kind: input, shape index: {}]
  %s4 = inlined_call_operand.vmem [shape: f32[24,1], index: 4, kind: input, shape index: {}]
  %s5 = inlined_call_operand.vmem [shape: f32[24,1], index: 5, kind: input, shape index: {}]
  %s6 = inlined_call_operand.vmem [shape: f32[24,1], index: 6, kind: input, shape index: {}]
  %s7 = inlined_call_operand.hbm [shape: bf16[2,24,1024], index: 7, kind: output, shape index: {0}]
  %s8 = inlined_call_operand.hbm [shape: f32[2,24,1024], index: 8, kind: output, shape index: {1}]
  %9 = xla_tuple %s7, %s8
  %s10 = sld [smem:[#allocation0]]
  $region73: #{tpu_custom_call.1} parent=0
    _
  %s12 = ssub.s32 1, %s10
  %s13 = scalar_select 0, %s12, %s10
  $region1: #{tpu_custom_call.1} parent=0
    #allocation2 [shape = 'u8[131072]{0}', space=vmem, size = 0x20000, scoped, tag = 'input window, operand 0']
    #allocation3 [shape = 's32[2]{0}', space=sflag, size = 0x8, scoped, tag = 'scoped memory for tpu_custom_call.1']
    #allocation4 [shape = 's32[2]{0}', space=sflag, size = 0x8, scoped, tag = 'scoped memory for tpu_custom_call.1']
    #allocation5 [shape = 'u8[98304]{0}', space=vmem, size = 0x18000, scoped, tag = 'output window, operand 0']
    #allocation6 [shape = 'u8[196608]{0}', space=vmem, size = 0x30000, scoped, tag = 'output window, operand 1']
    #allocation7 [shape = 's32[2]{0}', space=sflag, size = 0x8, scoped, tag = 'scoped memory for tpu_custom_call.1']
    %14 = vsyncpa [#allocation3], 0
    %s15 = scalar_lea.sflag [#allocation3], 1
    %16 = vsyncpa %s15, 0
    %17 = vsyncpa [#allocation4], 0
    %s18 = scalar_lea.sflag [#allocation4], 1
    %19 = vsyncpa %s18, 0
    %20 = vsyncpa [#allocation7], 0
    %s21 = scalar_lea.sflag [#allocation7], 1
    %22 = vsyncpa %s21, 0
    loop: start=0, step=1, limit=4
    $region2: #{tpu_custom_call.1} parent=1 // loop_pre_header
      _
    $region3: #{tpu_custom_call.1} parent=1 // loop_header
      %s24 = sphi 0, %s28
      %p25 = scmp.ge.s32.totalorder %s24, 4
      %s31 = sphi 0, %s43
      %s32 = sphi 0, %s39
      %s33 = sphi 0, %s31
      %s34 = sphi 0, %s32
      %s35 = sphi 0, %s33
      %s36 = sphi 0, %s34
      %s48 = sphi 0, %s50
      %s51 = sphi 0, %s48
      %s52 = sphi 0, %s51
      %s68 = sphi 0, %s52
      %s72 = sphi 0, %s72
      %s74 = sphi 0, %s72
      %s75 = sphi 0, %s74
      %s89 = sphi 0, %s75
      %s93 = sphi 0, %s93
      %s95 = sphi 0, %s93
      %s96 = sphi 0, %s95
      %s110 = sphi 0, %s96
      %s114 = sphi 0, %s114
      %s116 = sphi 0, %s114
      %s117 = sphi 0, %s116
      %s131 = sphi 0, %s117
      %s135 = sphi 0, %s135
      %s137 = sphi 0, %s135
      %s138 = sphi 0, %s137
      %s152 = sphi 0, %s138
      %s156 = sphi 0, %s156
      %s158 = sphi 0, %s156
      %s159 = sphi 0, %s158
      %s173 = sphi 0, %s159
      %s177 = sphi 0, %s177
      %s179 = sphi 0, %s177
      %s180 = sphi 0, %s179
      %s194 = sphi 0, %s180
      %s202 = sphi 0, %s204
      %s205 = sphi 0, %s202
      %s206 = sphi 0, %s205
      %s222 = sphi 0, %s206
      %s230 = sphi 0, %s232
      %s233 = sphi 0, %s230
      %s234 = sphi 0, %s233
      %s250 = sphi 0, %s234
    $region4: #{tpu_custom_call.1} parent=1 // loop_header_branch
      %27 = sbr.rel (%p25) target = $region8
    $region5: #{tpu_custom_call.1} parent=1 // loop_body
      %s29 = ssub.s32 %s24, 1
      %s30 = ssub.s32 %s24, 2
      %s37 = sadd.s32 1, %s32
      %p38 = scmp.ge.s32.totalorder %s37, 1
      %s39 = scalar_select %p38, 0, %s37
      %s40 = sadd.s32 1, %s31
      %s41 = scalar_select %p38, %s40, %s31
      %p42 = scmp.ge.s32.totalorder %s41, 2
      %s43 = scalar_select %p42, 0, %s41
      %s44 = ssub.s32 %s31, %s43
      %s45 = ssub.s32 %s32, %s39
      %s46 = sor.u32 %s44, %s45
      %p47 = scmp.eq.s32.totalorder %s46, 0
      %s49 = sadd.s32 %s48, 1
      %s50 = scalar_select %p47, %s48, %s49
      %p53 = pneg %p47
      %p54 = scmp.eq.s32.totalorder %s24, 1
      %p55 = por %p53, %p54
      %p56 = scmp.ne.s32.totalorder %s48, %s51
      %p57 = scmp.eq.s32.totalorder %s24, 0
      %p58 = por %p56, %p57
      %p59 = scmp.ne.s32.totalorder %s48, %s51
      %p60 = scmp.eq.s32.totalorder %s29, 1
      %p61 = por %p59, %p60
      %p62 = scmp.ne.s32.totalorder %s51, %s52
      %p63 = scmp.eq.s32.totalorder %s29, 0
      %p64 = por %p62, %p63
      %p65 = scmp.ne.s32.totalorder %s51, %s52
      %p66 = scmp.eq.s32.totalorder %s30, 1
      %p67 = por %p65, %p66
      %p69 = scmp.ne.s32.totalorder %s52, %s68
      %p70 = scmp.eq.s32.totalorder %s30, 0
      %p71 = por %p69, %p70
      %s73 = sadd.s32 %s72, 1
      %p76 = scmp.eq.s32.totalorder %s24, 1
      %p77 = scmp.ne.s32.totalorder %s72, %s74
      %p78 = scmp.eq.s32.totalorder %s24, 0
      %p79 = por %p77, %p78
      %p80 = scmp.ne.s32.totalorder %s72, %s74
      %p81 = scmp.eq.s32.totalorder %s29, 1
      %p82 = por %p80, %p81
      %p83 = scmp.ne.s32.totalorder %s74, %s75
      %p84 = scmp.eq.s32.totalorder %s29, 0
      %p85 = por %p83, %p84
      %p86 = scmp.ne.s32.totalorder %s74, %s75
      %p87 = scmp.eq.s32.totalorder %s30, 1
      %p88 = por %p86, %p87
      %p90 = scmp.ne.s32.totalorder %s75, %s89
      %p91 = scmp.eq.s32.totalorder %s30, 0
      %p92 = por %p90, %p91
      %s94 = sadd.s32 %s93, 1
      %p97 = scmp.eq.s32.totalorder %s24, 1
      %p98 = scmp.ne.s32.totalorder %s93, %s95
      %p99 = scmp.eq.s32.totalorder %s24, 0
      %p100 = por %p98, %p99
      %p101 = scmp.ne.s32.totalorder %s93, %s95
      %p102 = scmp.eq.s32.totalorder %s29, 1
      %p103 = por %p101, %p102
      %p104 = scmp.ne.s32.totalorder %s95, %s96
      %p105 = scmp.eq.s32.totalorder %s29, 0
      %p106 = por %p104, %p105
      %p107 = scmp.ne.s32.totalorder %s95, %s96
      %p108 = scmp.eq.s32.totalorder %s30, 1
      %p109 = por %p107, %p108
      %p111 = scmp.ne.s32.totalorder %s96, %s110
      %p112 = scmp.eq.s32.totalorder %s30, 0
      %p113 = por %p111, %p112
      %s115 = sadd.s32 %s114, 1
      %p118 = scmp.eq.s32.totalorder %s24, 1
      %p119 = scmp.ne.s32.totalorder %s114, %s116
      %p120 = scmp.eq.s32.totalorder %s24, 0
      %p121 = por %p119, %p120
      %p122 = scmp.ne.s32.totalorder %s114, %s116
      %p123 = scmp.eq.s32.totalorder %s29, 1
      %p124 = por %p122, %p123
      %p125 = scmp.ne.s32.totalorder %s116, %s117
      %p126 = scmp.eq.s32.totalorder %s29, 0
      %p127 = por %p125, %p126
      %p128 = scmp.ne.s32.totalorder %s116, %s117
      %p129 = scmp.eq.s32.totalorder %s30, 1
      %p130 = por %p128, %p129
      %p132 = scmp.ne.s32.totalorder %s117, %s131
      %p133 = scmp.eq.s32.totalorder %s30, 0
      %p134 = por %p132, %p133
      %s136 = sadd.s32 %s135, 1
      %p139 = scmp.eq.s32.totalorder %s24, 1
      %p140 = scmp.ne.s32.totalorder %s135, %s137
      %p141 = scmp.eq.s32.totalorder %s24, 0
      %p142 = por %p140, %p141
      %p143 = scmp.ne.s32.totalorder %s135, %s137
      %p144 = scmp.eq.s32.totalorder %s29, 1
      %p145 = por %p143, %p144
      %p146 = scmp.ne.s32.totalorder %s137, %s138
      %p147 = scmp.eq.s32.totalorder %s29, 0
      %p148 = por %p146, %p147
      %p149 = scmp.ne.s32.totalorder %s137, %s138
      %p150 = scmp.eq.s32.totalorder %s30, 1
      %p151 = por %p149, %p150
      %p153 = scmp.ne.s32.totalorder %s138, %s152
      %p154 = scmp.eq.s32.totalorder %s30, 0
      %p155 = por %p153, %p154
      %s157 = sadd.s32 %s156, 1
      %p160 = scmp.eq.s32.totalorder %s24, 1
      %p161 = scmp.ne.s32.totalorder %s156, %s158
      %p162 = scmp.eq.s32.totalorder %s24, 0
      %p163 = por %p161, %p162
      %p164 = scmp.ne.s32.totalorder %s156, %s158
      %p165 = scmp.eq.s32.totalorder %s29, 1
      %p166 = por %p164, %p165
      %p167 = scmp.ne.s32.totalorder %s158, %s159
      %p168 = scmp.eq.s32.totalorder %s29, 0
      %p169 = por %p167, %p168
      %p170 = scmp.ne.s32.totalorder %s158, %s159
      %p171 = scmp.eq.s32.totalorder %s30, 1
      %p172 = por %p170, %p171
      %p174 = scmp.ne.s32.totalorder %s159, %s173
      %p175 = scmp.eq.s32.totalorder %s30, 0
      %p176 = por %p174, %p175
      %s178 = sadd.s32 %s177, 1
      %p181 = scmp.eq.s32.totalorder %s24, 1
      %p182 = scmp.ne.s32.totalorder %s177, %s179
      %p183 = scmp.eq.s32.totalorder %s24, 0
      %p184 = por %p182, %p183
      %p185 = scmp.ne.s32.totalorder %s177, %s179
      %p186 = scmp.eq.s32.totalorder %s29, 1
      %p187 = por %p185, %p186
      %p188 = scmp.ne.s32.totalorder %s179, %s180
      %p189 = scmp.eq.s32.totalorder %s29, 0
      %p190 = por %p188, %p189
      %p191 = scmp.ne.s32.totalorder %s179, %s180
      %p192 = scmp.eq.s32.totalorder %s30, 1
      %p193 = por %p191, %p192
      %p195 = scmp.ne.s32.totalorder %s180, %s194
      %p196 = scmp.eq.s32.totalorder %s30, 0
      %p197 = por %p195, %p196
      %s198 = ssub.s32 %s31, %s43
      %s199 = ssub.s32 %s32, %s39
      %s200 = sor.u32 %s198, %s199
      %p201 = scmp.eq.s32.totalorder %s200, 0
      %s203 = sadd.s32 %s202, 1
      %s204 = scalar_select %p201, %s202, %s203
      %p207 = pneg %p201
      %p208 = scmp.eq.s32.totalorder %s24, 1
      %p209 = por %p207, %p208
      %p210 = scmp.ne.s32.totalorder %s202, %s205
      %p211 = scmp.eq.s32.totalorder %s24, 0
      %p212 = por %p210, %p211
      %p213 = scmp.ne.s32.totalorder %s202, %s205
      %p214 = scmp.eq.s32.totalorder %s29, 1
      %p215 = por %p213, %p214
      %p216 = scmp.ne.s32.totalorder %s205, %s206
      %p217 = scmp.eq.s32.totalorder %s29, 0
      %p218 = por %p216, %p217
      %p219 = scmp.ne.s32.totalorder %s205, %s206
      %p220 = scmp.eq.s32.totalorder %s30, 1
      %p221 = por %p219, %p220
      %p223 = scmp.ne.s32.totalorder %s206, %s222
      %p224 = scmp.eq.s32.totalorder %s30, 0
      %p225 = por %p223, %p224
      %s226 = ssub.s32 %s31, %s43
      %s227 = ssub.s32 %s32, %s39
      %s228 = sor.u32 %s226, %s227
      %p229 = scmp.eq.s32.totalorder %s228, 0
      %s231 = sadd.s32 %s230, 1
      %s232 = scalar_select %p229, %s230, %s231
      %p235 = pneg %p229
      %p236 = scmp.eq.s32.totalorder %s24, 1
      %p237 = por %p235, %p236
      %p238 = scmp.ne.s32.totalorder %s230, %s233
      %p239 = scmp.eq.s32.totalorder %s24, 0
      %p240 = por %p238, %p239
      %p241 = scmp.ne.s32.totalorder %s230, %s233
      %p242 = scmp.eq.s32.totalorder %s29, 1
      %p243 = por %p241, %p242
      %p244 = scmp.ne.s32.totalorder %s233, %s234
      %p245 = scmp.eq.s32.totalorder %s29, 0
      %p246 = por %p244, %p245
      %p247 = scmp.ne.s32.totalorder %s233, %s234
      %p248 = scmp.eq.s32.totalorder %s30, 1
      %p249 = por %p247, %p248
      %p251 = scmp.ne.s32.totalorder %s234, %s250
      %p252 = scmp.eq.s32.totalorder %s30, 0
      %p253 = por %p251, %p252
      %p254 = scmp.le.s32.totalorder 1, %s24
      %p255 = scmp.lt.s32.totalorder %s24, 3
      %p256 = pnand %p254, %p255
      %p257 = pneg %p256
      // Predicated region
      $region9: #{tpu_custom_call.1} parent=5 // pred_check
        _
      $region10: #{tpu_custom_call.1} parent=5 // pred_check_branch
        %259 = sbr.rel (%p256) target = $region12
      $region11: #{tpu_custom_call.1} parent=5 // pred_region
        %s260 = ssub.s32 %s24, 1
        // Predicated region
        $region13: #{tpu_custom_call.1} parent=11 // pred_check
          %p261 = pneg %p85
        $region14: #{tpu_custom_call.1} parent=11 // pred_check_branch
          %263 = sbr.rel (%p261) target = $region16
        $region15: #{tpu_custom_call.1} parent=11 // pred_region
          _
        $region16: #{tpu_custom_call.1} parent=11 // pred_fallthru
          _
        // Predicated region
        $region17: #{tpu_custom_call.1} parent=11 // pred_check
          %p264 = pneg %p106
        $region18: #{tpu_custom_call.1} parent=11 // pred_check_branch
          %266 = sbr.rel (%p264) target = $region20
        $region19: #{tpu_custom_call.1} parent=11 // pred_region
          _
        $region20: #{tpu_custom_call.1} parent=11 // pred_fallthru
          _
        // Predicated region
        $region21: #{tpu_custom_call.1} parent=11 // pred_check
          %p267 = pneg %p127
        $region22: #{tpu_custom_call.1} parent=11 // pred_check_branch
          %269 = sbr.rel (%p267) target = $region24
        $region23: #{tpu_custom_call.1} parent=11 // pred_region
          _
        $region24: #{tpu_custom_call.1} parent=11 // pred_fallthru
          _
        // Predicated region
        $region25: #{tpu_custom_call.1} parent=11 // pred_check
          %p270 = pneg %p148
        $region26: #{tpu_custom_call.1} parent=11 // pred_check_branch
          %272 = sbr.rel (%p270) target = $region28
        $region27: #{tpu_custom_call.1} parent=11 // pred_region
          _
        $region28: #{tpu_custom_call.1} parent=11 // pred_fallthru
          _
        // Predicated region
        $region29: #{tpu_custom_call.1} parent=11 // pred_check
          %p273 = pneg %p169
        $region30: #{tpu_custom_call.1} parent=11 // pred_check_branch
          %275 = sbr.rel (%p273) target = $region32
        $region31: #{tpu_custom_call.1} parent=11 // pred_region
          _
        $region32: #{tpu_custom_call.1} parent=11 // pred_fallthru
          _
        // Predicated region
        $region33: #{tpu_custom_call.1} parent=11 // pred_check
          %p276 = pneg %p190
        $region34: #{tpu_custom_call.1} parent=11 // pred_check_branch
          %278 = sbr.rel (%p276) target = $region36
        $region35: #{tpu_custom_call.1} parent=11 // pred_region
          _
        $region36: #{tpu_custom_call.1} parent=11 // pred_fallthru
          _
      $region12: #{tpu_custom_call.1} parent=5 // pred_fallthru
        _
      %p279 = scmp.lt.s32.totalorder %s24, 2
      // Predicated region
      $region37: #{tpu_custom_call.1} parent=5 // pred_check
        %p280 = pneg %p279
      $region38: #{tpu_custom_call.1} parent=5 // pred_check_branch
        %282 = sbr.rel (%p280) target = $region40
      $region39: #{tpu_custom_call.1} parent=5 // pred_region
        // Predicated region
        $region41: #{tpu_custom_call.1} parent=39 // pred_check
          %p283 = pneg %p58
        $region42: #{tpu_custom_call.1} parent=39 // pred_check_branch
          %285 = sbr.rel (%p283) target = $region44
        $region43: #{tpu_custom_call.1} parent=39 // pred_region
          %s286 = sand.u32 %s48, 1
          %s287 = scalar_lea.sflag [#allocation3], %s286
          %s288 = sand.u32 %s48, 1
          %s289 = smul.addr %s288, 128
          %s290 = scalar_lea.vmem [#allocation2], %s289
          %s291 = smul.u32 8, %s32
          %s293 = ssub.s32 2048, 2048
          %294 = vsyncadd %s287, %s293
          %s295 = smul.addr %s31, 16
          %s296 = sadd.s32 %s291, %s295
          %s297 = smul.addr %s296, 128
          %s298 = scalar_lea.hbm %s0, %s297
          %s299 = sshll.u32 %s290, 4
          %s300 = int_to_ptr.vmem [resolvable:$true] %s299
          %305 = dma.hbm_to_vmem [thread:$0]  %s298, 2048, %s300, %s287, 1024, 1024, 64
        $region44: #{tpu_custom_call.1} parent=39 // pred_fallthru
          _
      $region40: #{tpu_custom_call.1} parent=5 // pred_fallthru
        _
      %p306 = scmp.le.s32.totalorder 1, %s24
      %p307 = scmp.lt.s32.totalorder %s24, 3
      %p308 = pnand %p306, %p307
      %p309 = pneg %p308
      // Predicated region
      $region45: #{tpu_custom_call.1} parent=5 // pred_check
        _
      $region46: #{tpu_custom_call.1} parent=5 // pred_check_branch
        %311 = sbr.rel (%p308) target = $region48
      $region47: #{tpu_custom_call.1} parent=5 // pred_region
        %s312 = ssub.s32 %s24, 1
        %s313 = sand.u32 %s51, 1
        %s314 = scalar_lea.sflag [#allocation3], %s313
        %s315 = sand.u32 %s51, 1
        %s316 = smul.addr %s315, 128
        %s317 = scalar_lea.vmem [#allocation2], %s316
        // Predicated region
        $region49: #{tpu_custom_call.1} parent=47 // pred_check
          %p318 = pneg %p64
        $region50: #{tpu_custom_call.1} parent=47 // pred_check_branch
          %320 = sbr.rel (%p318) target = $region52
        $region51: #{tpu_custom_call.1} parent=47 // pred_region
          %321 = dma.done %s314, 2048
        $region52: #{tpu_custom_call.1} parent=47 // pred_fallthru
          _
        %s322 = sand.u32 %s51, 1
        %s323 = scalar_lea.sflag [#allocation3], %s322
        %s324 = sand.u32 %s51, 1
        %s325 = smul.addr %s324, 128
        %s326 = scalar_lea.vmem [#allocation2], %s325
        %p327 = pneg %p64
        %p328 = pneg %p61
        %p329 = pneg %p85
        %p330 = pneg %p82
        %p331 = pneg %p106
        %p332 = pneg %p103
        %p333 = pneg %p127
        %p334 = pneg %p124
        %p335 = pneg %p148
        %p336 = pneg %p145
        %p337 = pneg %p169
        %p338 = pneg %p166
        %p339 = pneg %p190
        %p340 = pneg %p187
        %p341 = pneg %p218
        %p342 = pneg %p215
        %s343 = sand.u32 %s205, 1
        %s344 = scalar_lea.sflag [#allocation4], %s343
        %s345 = sand.u32 %s205, 1
        %s346 = smul.addr %s345, 96
        %s347 = scalar_lea.vmem [#allocation5], %s346
        %p348 = pneg %p246
        %p349 = pneg %p243
        %s350 = sand.u32 %s233, 1
        %s351 = scalar_lea.sflag [#allocation7], %s350
        %s352 = sand.u32 %s233, 1
        %s353 = smul.addr %s352, 192
        %s354 = scalar_lea.vmem [#allocation6], %s353
        %s355 = smul.u32 8, %s34
        %s356 = smul.u32 8, %s34
        %s357 = smul.u32 8, %s34
        %v358 = vld [vmem:[%s1] sm:$0xff]
        %v359 = vld [vmem:[%s1 + $0x8] sm:$0xff]
        %v360 = vld [vmem:[%s1 + $0x10] sm:$0xff]
        %v361 = vld [vmem:[%s317] sm:$0xff]
        %v362 = vld [vmem:[%s317 + $0x8] sm:$0xff]
        %v363 = vld [vmem:[%s317 + $0x10] sm:$0xff]
        %v364 = vld [vmem:[%s317 + $0x18] sm:$0xff]
        %v365 = vld [vmem:[%s317 + $0x20] sm:$0xff]
        %v366 = vld [vmem:[%s317 + $0x28] sm:$0xff]
        %v367 = vld [vmem:[%s317 + $0x30] sm:$0xff]
        %v368 = vld [vmem:[%s317 + $0x38] sm:$0xff]
        %v369 = vld [vmem:[%s317 + $0x40] sm:$0xff]
        %v370 = vld [vmem:[%s317 + $0x48] sm:$0xff]
        %v371 = vld [vmem:[%s317 + $0x50] sm:$0xff]
        %v372 = vld [vmem:[%s317 + $0x58] sm:$0xff]
        %v373 = vld [vmem:[%s317 + $0x60] sm:$0xff]
        %v374 = vld [vmem:[%s317 + $0x68] sm:$0xff]
        %v375 = vld [vmem:[%s317 + $0x70] sm:$0xff]
        %v376 = vld [vmem:[%s317 + $0x78] sm:$0xff]
        %v377 = vld [vmem:[%s2] sm:$0xff]
        %v378 = vld [vmem:[%s2 + $0x8] sm:$0xff]
        %v379 = vld [vmem:[%s2 + $0x10] sm:$0xff]
        %381 = vset.pattern.permute.xlu0 0
        %382 = vperm.xlu0 %381, %v377
        %v383 = vpop.permute.xlu0 %382
        %386 = vset.pattern.permute.xlu0 0
        %387 = vperm.xlu0 %386, %v378
        %v388 = vpop.permute.xlu0 %387
        %391 = vset.pattern.permute.xlu0 0
        %392 = vperm.xlu0 %391, %v379
        %v393 = vpop.permute.xlu0 %392
        %vm395 = vcmask 130048
        %v397 = vsel %vm395, %v358, 0
        %v400 = vsel %vm395, %v359, 0
        %v403 = vsel %vm395, %v360, 0
        %405 = vmatprep.subr.mxu0 %v362
        %406 = vmatpush1.msra.mxu0 %v361
        %407 = vmatprep.subr.mxu0 %v370
        %408 = vmatpush1.msra.mxu0 %v369
        %409 = vmatprep.subr.mxu0 0.0
        %410 = vmatpush1.msra.mxu0 0.0
        %411 = vmatprep.subr.mxu0 0.0
        %412 = vmatpush1.msra.mxu0 0.0
        %413 = vmatprep.subr.mxu0 0.0
        %414 = vmatpush1.msra.mxu0 0.0
        %415 = vmatprep.subr.mxu0 0.0
        %416 = vmatpush1.msra.mxu0 0.0
        %417 = vmatprep.subr.mxu0 0.0
        %418 = vmatpush1.msra.mxu0 0.0
        %419 = vmatprep.subr.mxu0 0.0
        %420 = vmatpush1.msra.mxu0 0.0
        %421 = vmatprep.subr.mxu0 0.0
        %422 = vmatpush1.msra.mxu0 0.0
        %423 = vmatprep.subr.mxu0 0.0
        %424 = vmatpush1.msra.mxu0 0.0
        %425 = vmatprep.subr.mxu0 0.0
        %426 = vmatpush1.msra.mxu0 0.0
        %427 = vmatprep.subr.mxu0 0.0
        %428 = vmatpush1.msra.mxu0 0.0
        %429 = vmatprep.subr.mxu0 0.0
        %430 = vmatpush1.msra.mxu0 0.0
        %431 = vmatprep.subr.mxu0 0.0
        %432 = vmatpush1.msra.mxu0 0.0
        %433 = vmatprep.subr.mxu0 0.0
        %434 = vmatpush1.msra.mxu0 0.0
        %435 = vmatprep.subr.mxu0 0.0
        %436 = vmatpush1.msra.mxu0 0.0
        %437 = vmatprep.subr.mxu0 0.0
        %438 = vmatpush1.msra.mxu0 0.0
        %439 = vmatprep.subr.mxu0 0.0
        %440 = vmatpush1.msra.mxu0 0.0
        %441 = vmatprep.subr.mxu0 0.0
        %442 = vmatpush1.msra.mxu0 0.0
        %443 = vmatprep.subr.mxu0 0.0
        %444 = vmatpush1.msra.mxu0 0.0
        %445 = vmatprep.subr.mxu0 0.0
        %446 = vmatpush1.msra.mxu0 0.0
        %447 = vmatprep.subr.mxu0 0.0
        %448 = vmatpush1.msra.mxu0 0.0
        %449 = vmatprep.subr.mxu0 0.0
        %450 = vmatpush1.msra.mxu0 0.0
        %451 = vmatprep.subr.mxu0 0.0
        %452 = vmatpush1.msra.mxu0 0.0
        %453 = vmatprep.subr.mxu0 0.0
        %454 = vmatpush1.msra.mxu0 0.0
        %455 = vmatprep.subr.mxu0 0.0
        %456 = vmatpush1.msra.mxu0 0.0
        %457 = vmatprep.subr.mxu0 0.0
        %458 = vmatpush1.msra.mxu0 0.0
        %459 = vmatprep.subr.mxu0 0.0
        %460 = vmatpush1.msra.mxu0 0.0
        %461 = vmatprep.subr.mxu0 0.0
        %462 = vmatpush1.msra.mxu0 0.0
        %463 = vmatprep.subr.mxu0 0.0
        %464 = vmatpush1.msra.mxu0 0.0
        %465 = vmatprep.subr.mxu0 0.0
        %466 = vmatpush1.msra.mxu0 0.0
        %467 = vmatprep.subr.mxu0 0.0
        %468 = vmatpush1.msra.mxu0 0.0
        %469 = vmatprep.mubr.f32.mxu0 0.0
        %470 = vmatmul.mubr.f32.gmra.mrb[0].mxu0 %v397
        %v471 = vpop.f32.mrb[0].mxu0
        %v472 = vadd.f32 %v383, %v471
        %v473 = vpop.f32.mrb[0].mxu0
        %v474 = vadd.f32 %v383, %v473
        %475 = vmatprep.mubr.f32.mxu0 0.0
        %476 = vmatmul.mubr.f32.gmra.mrb[0].mxu0 %v400
        %v477 = vpop.f32.mrb[0].mxu0
        %v478 = vadd.f32 %v388, %v477
        %v479 = vpop.f32.mrb[0].mxu0
        %v480 = vadd.f32 %v388, %v479
        %481 = vmatprep.mubr.f32.mxu0 0.0
        %482 = vmatmul.mubr.f32.gmra.mrb[0].mxu0 %v403
        %v483 = vpop.f32.mrb[0].mxu0
        %v484 = vadd.f32 %v393, %v483
        %v485 = vpop.f32.mrb[0].mxu0
        %v486 = vadd.f32 %v393, %v485
        %487 = vdwg.mxu0
        %488 = vmatprep.subr.mxu0 %v364
        %489 = vmatpush1.msra.mxu0 %v363
        %490 = vmatprep.subr.mxu0 %v372
        %491 = vmatpush1.msra.mxu0 %v371
        %492 = vmatprep.subr.mxu0 0.0
        %493 = vmatpush1.msra.mxu0 0.0
        %494 = vmatprep.subr.mxu0 0.0
        %495 = vmatpush1.msra.mxu0 0.0
        %496 = vmatprep.subr.mxu0 0.0
        %497 = vmatpush1.msra.mxu0 0.0
        %498 = vmatprep.subr.mxu0 0.0
        %499 = vmatpush1.msra.mxu0 0.0
        %500 = vmatprep.subr.mxu0 0.0
        %501 = vmatpush1.msra.mxu0 0.0
        %502 = vmatprep.subr.mxu0 0.0
        %503 = vmatpush1.msra.mxu0 0.0
        %504 = vmatprep.subr.mxu0 0.0
        %505 = vmatpush1.msra.mxu0 0.0
        %506 = vmatprep.subr.mxu0 0.0
        %507 = vmatpush1.msra.mxu0 0.0
        %508 = vmatprep.subr.mxu0 0.0
        %509 = vmatpush1.msra.mxu0 0.0
        %510 = vmatprep.subr.mxu0 0.0
        %511 = vmatpush1.msra.mxu0 0.0
        %512 = vmatprep.subr.mxu0 0.0
        %513 = vmatpush1.msra.mxu0 0.0
        %514 = vmatprep.subr.mxu0 0.0
        %515 = vmatpush1.msra.mxu0 0.0
        %516 = vmatprep.subr.mxu0 0.0
        %517 = vmatpush1.msra.mxu0 0.0
        %518 = vmatprep.subr.mxu0 0.0
        %519 = vmatpush1.msra.mxu0 0.0
        %520 = vmatprep.subr.mxu0 0.0
        %521 = vmatpush1.msra.mxu0 0.0
        %522 = vmatprep.subr.mxu0 0.0
        %523 = vmatpush1.msra.mxu0 0.0
        %524 = vmatprep.subr.mxu0 0.0
        %525 = vmatpush1.msra.mxu0 0.0
        %526 = vmatprep.subr.mxu0 0.0
        %527 = vmatpush1.msra.mxu0 0.0
        %528 = vmatprep.subr.mxu0 0.0
        %529 = vmatpush1.msra.mxu0 0.0
        %530 = vmatprep.subr.mxu0 0.0
        %531 = vmatpush1.msra.mxu0 0.0
        %532 = vmatprep.subr.mxu0 0.0
        %533 = vmatpush1.msra.mxu0 0.0
        %534 = vmatprep.subr.mxu0 0.0
        %535 = vmatpush1.msra.mxu0 0.0
        %536 = vmatprep.subr.mxu0 0.0
        %537 = vmatpush1.msra.mxu0 0.0
        %538 = vmatprep.subr.mxu0 0.0
        %539 = vmatpush1.msra.mxu0 0.0
        %540 = vmatprep.subr.mxu0 0.0
        %541 = vmatpush1.msra.mxu0 0.0
        %542 = vmatprep.subr.mxu0 0.0
        %543 = vmatpush1.msra.mxu0 0.0
        %544 = vmatprep.subr.mxu0 0.0
        %545 = vmatpush1.msra.mxu0 0.0
        %546 = vmatprep.subr.mxu0 0.0
        %547 = vmatpush1.msra.mxu0 0.0
        %548 = vmatprep.subr.mxu0 0.0
        %549 = vmatpush1.msra.mxu0 0.0
        %550 = vmatprep.subr.mxu0 0.0
        %551 = vmatpush1.msra.mxu0 0.0
        %552 = vmatprep.mubr.f32.mxu0 0.0
        %553 = vmatmul.mubr.f32.gmra.mrb[0].mxu0 %v397
        %v554 = vpop.f32.mrb[0].mxu0
        %v555 = vadd.f32 %v383, %v554
        %v556 = vpop.f32.mrb[0].mxu0
        %v557 = vadd.f32 %v383, %v556
        %558 = vmatprep.mubr.f32.mxu0 0.0
        %559 = vmatmul.mubr.f32.gmra.mrb[0].mxu0 %v400
        %v560 = vpop.f32.mrb[0].mxu0
        %v561 = vadd.f32 %v388, %v560
        %v562 = vpop.f32.mrb[0].mxu0
        %v563 = vadd.f32 %v388, %v562
        %564 = vmatprep.mubr.f32.mxu0 0.0
        %565 = vmatmul.mubr.f32.gmra.mrb[0].mxu0 %v403
        %v566 = vpop.f32.mrb[0].mxu0
        %v567 = vadd.f32 %v393, %v566
        %v568 = vpop.f32.mrb[0].mxu0
        %v569 = vadd.f32 %v393, %v568
        %570 = vdwg.mxu0
        %571 = vmatprep.subr.mxu0 %v366
        %572 = vmatpush1.msra.mxu0 %v365
        %573 = vmatprep.subr.mxu0 %v374
        %574 = vmatpush1.msra.mxu0 %v373
        %575 = vmatprep.subr.mxu0 0.0
        %576 = vmatpush1.msra.mxu0 0.0
        %577 = vmatprep.subr.mxu0 0.0
        %578 = vmatpush1.msra.mxu0 0.0
        %579 = vmatprep.subr.mxu0 0.0
        %580 = vmatpush1.msra.mxu0 0.0
        %581 = vmatprep.subr.mxu0 0.0
        %582 = vmatpush1.msra.mxu0 0.0
        %583 = vmatprep.subr.mxu0 0.0
        %584 = vmatpush1.msra.mxu0 0.0
        %585 = vmatprep.subr.mxu0 0.0
        %586 = vmatpush1.msra.mxu0 0.0
        %587 = vmatprep.subr.mxu0 0.0
        %588 = vmatpush1.msra.mxu0 0.0
        %589 = vmatprep.subr.mxu0 0.0
        %590 = vmatpush1.msra.mxu0 0.0
        %591 = vmatprep.subr.mxu0 0.0
        %592 = vmatpush1.msra.mxu0 0.0
        %593 = vmatprep.subr.mxu0 0.0
        %594 = vmatpush1.msra.mxu0 0.0
        %595 = vmatprep.subr.mxu0 0.0
        %596 = vmatpush1.msra.mxu0 0.0
        %597 = vmatprep.subr.mxu0 0.0
        %598 = vmatpush1.msra.mxu0 0.0
        %599 = vmatprep.subr.mxu0 0.0
        %600 = vmatpush1.msra.mxu0 0.0
        %601 = vmatprep.subr.mxu0 0.0
        %602 = vmatpush1.msra.mxu0 0.0
        %603 = vmatprep.subr.mxu0 0.0
        %604 = vmatpush1.msra.mxu0 0.0
        %605 = vmatprep.subr.mxu0 0.0
        %606 = vmatpush1.msra.mxu0 0.0
        %607 = vmatprep.subr.mxu0 0.0
        %608 = vmatpush1.msra.mxu0 0.0
        %609 = vmatprep.subr.mxu0 0.0
        %610 = vmatpush1.msra.mxu0 0.0
        %611 = vmatprep.subr.mxu0 0.0
        %612 = vmatpush1.msra.mxu0 0.0
        %613 = vmatprep.subr.mxu0 0.0
        %614 = vmatpush1.msra.mxu0 0.0
        %615 = vmatprep.subr.mxu0 0.0
        %616 = vmatpush1.msra.mxu0 0.0
        %617 = vmatprep.subr.mxu0 0.0
        %618 = vmatpush1.msra.mxu0 0.0
        %619 = vmatprep.subr.mxu0 0.0
        %620 = vmatpush1.msra.mxu0 0.0
        %621 = vmatprep.subr.mxu0 0.0
        %622 = vmatpush1.msra.mxu0 0.0
        %623 = vmatprep.subr.mxu0 0.0
        %624 = vmatpush1.msra.mxu0 0.0
        %625 = vmatprep.subr.mxu0 0.0
        %626 = vmatpush1.msra.mxu0 0.0
        %627 = vmatprep.subr.mxu0 0.0
        %628 = vmatpush1.msra.mxu0 0.0
        %629 = vmatprep.subr.mxu0 0.0
        %630 = vmatpush1.msra.mxu0 0.0
        %631 = vmatprep.subr.mxu0 0.0
        %632 = vmatpush1.msra.mxu0 0.0
        %633 = vmatprep.subr.mxu0 0.0
        %634 = vmatpush1.msra.mxu0 0.0
        %635 = vmatprep.mubr.f32.mxu0 0.0
        %636 = vmatmul.mubr.f32.gmra.mrb[0].mxu0 %v397
        %v637 = vpop.f32.mrb[0].mxu0
        %v638 = vadd.f32 %v383, %v637
        %v639 = vpop.f32.mrb[0].mxu0
        %v640 = vadd.f32 %v383, %v639
        %641 = vmatprep.mubr.f32.mxu0 0.0
        %642 = vmatmul.mubr.f32.gmra.mrb[0].mxu0 %v400
        %v643 = vpop.f32.mrb[0].mxu0
        %v644 = vadd.f32 %v388, %v643
        %v645 = vpop.f32.mrb[0].mxu0
        %v646 = vadd.f32 %v388, %v645
        %647 = vmatprep.mubr.f32.mxu0 0.0
        %648 = vmatmul.mubr.f32.gmra.mrb[0].mxu0 %v403
        %v649 = vpop.f32.mrb[0].mxu0
        %v650 = vadd.f32 %v393, %v649
        %v651 = vpop.f32.mrb[0].mxu0
        %v652 = vadd.f32 %v393, %v651
        %653 = vdwg.mxu0
        %654 = vmatprep.subr.mxu0 %v368
        %655 = vmatpush1.msra.mxu0 %v367
        %656 = vmatprep.subr.mxu0 %v376
        %657 = vmatpush1.msra.mxu0 %v375
        %658 = vmatprep.subr.mxu0 0.0
        %659 = vmatpush1.msra.mxu0 0.0
        %660 = vmatprep.subr.mxu0 0.0
        %661 = vmatpush1.msra.mxu0 0.0
        %662 = vmatprep.subr.mxu0 0.0
        %663 = vmatpush1.msra.mxu0 0.0
        %664 = vmatprep.subr.mxu0 0.0
        %665 = vmatpush1.msra.mxu0 0.0
        %666 = vmatprep.subr.mxu0 0.0
        %667 = vmatpush1.msra.mxu0 0.0
        %668 = vmatprep.subr.mxu0 0.0
        %669 = vmatpush1.msra.mxu0 0.0
        %670 = vmatprep.subr.mxu0 0.0
        %671 = vmatpush1.msra.mxu0 0.0
        %672 = vmatprep.subr.mxu0 0.0
        %673 = vmatpush1.msra.mxu0 0.0
        %674 = vmatprep.subr.mxu0 0.0
        %675 = vmatpush1.msra.mxu0 0.0
        %676 = vmatprep.subr.mxu0 0.0
        %677 = vmatpush1.msra.mxu0 0.0
        %678 = vmatprep.subr.mxu0 0.0
        %679 = vmatpush1.msra.mxu0 0.0
        %680 = vmatprep.subr.mxu0 0.0
        %681 = vmatpush1.msra.mxu0 0.0
        %682 = vmatprep.subr.mxu0 0.0
        %683 = vmatpush1.msra.mxu0 0.0
        %684 = vmatprep.subr.mxu0 0.0
        %685 = vmatpush1.msra.mxu0 0.0
        %686 = vmatprep.subr.mxu0 0.0
        %687 = vmatpush1.msra.mxu0 0.0
        %688 = vmatprep.subr.mxu0 0.0
        %689 = vmatpush1.msra.mxu0 0.0
        %690 = vmatprep.subr.mxu0 0.0
        %691 = vmatpush1.msra.mxu0 0.0
        %692 = vmatprep.subr.mxu0 0.0
        %693 = vmatpush1.msra.mxu0 0.0
        %694 = vmatprep.subr.mxu0 0.0
        %695 = vmatpush1.msra.mxu0 0.0
        %696 = vmatprep.subr.mxu0 0.0
        %697 = vmatpush1.msra.mxu0 0.0
        %698 = vmatprep.subr.mxu0 0.0
        %699 = vmatpush1.msra.mxu0 0.0
        %700 = vmatprep.subr.mxu0 0.0
        %701 = vmatpush1.msra.mxu0 0.0
        %702 = vmatprep.subr.mxu0 0.0
        %703 = vmatpush1.msra.mxu0 0.0
        %704 = vmatprep.subr.mxu0 0.0
        %705 = vmatpush1.msra.mxu0 0.0
        %706 = vmatprep.subr.mxu0 0.0
        %707 = vmatpush1.msra.mxu0 0.0
        %708 = vmatprep.subr.mxu0 0.0
        %709 = vmatpush1.msra.mxu0 0.0
        %710 = vmatprep.subr.mxu0 0.0
        %711 = vmatpush1.msra.mxu0 0.0
        %712 = vmatprep.subr.mxu0 0.0
        %713 = vmatpush1.msra.mxu0 0.0
        %714 = vmatprep.subr.mxu0 0.0
        %715 = vmatpush1.msra.mxu0 0.0
        %716 = vmatprep.subr.mxu0 0.0
        %717 = vmatpush1.msra.mxu0 0.0
        %718 = vmatprep.mubr.f32.mxu0 0.0
        %719 = vmatmul.mubr.f32.gmra.mrb[0].mxu0 %v397
        %v720 = vpop.f32.mrb[0].mxu0
        %v721 = vadd.f32 %v383, %v720
        %v722 = vpop.f32.mrb[0].mxu0
        %v723 = vadd.f32 %v383, %v722
        %724 = vmatprep.mubr.f32.mxu0 0.0
        %725 = vmatmul.mubr.f32.gmra.mrb[0].mxu0 %v400
        %v726 = vpop.f32.mrb[0].mxu0
        %v727 = vadd.f32 %v388, %v726
        %v728 = vpop.f32.mrb[0].mxu0
        %v729 = vadd.f32 %v388, %v728
        %730 = vmatprep.mubr.f32.mxu0 0.0
        %731 = vmatmul.mubr.f32.gmra.mrb[0].mxu0 %v403
        %v732 = vpop.f32.mrb[0].mxu0
        %v733 = vadd.f32 %v393, %v732
        %v734 = vpop.f32.mrb[0].mxu0
        %v735 = vadd.f32 %v393, %v734
        %736 = vdwg.mxu0
        %v737 = vpack.c.bf16 %v478, %v472
        %v738 = vpack.c.bf16 %v480, %v474
        %v739 = vpack.c.bf16 %v561, %v555
        %v740 = vpack.c.bf16 %v563, %v557
        %v741 = vpack.c.bf16 %v644, %v638
        %v742 = vpack.c.bf16 %v646, %v640
        %v743 = vpack.c.bf16 %v727, %v721
        %v744 = vpack.c.bf16 %v729, %v723
        %v745 = vpack.c.bf16 %v484, %v484
        %v746 = vpack.c.bf16 %v486, %v486
        %v747 = vpack.c.bf16 %v567, %v567
        %v748 = vpack.c.bf16 %v569, %v569
        %v749 = vpack.c.bf16 %v650, %v650
        %v750 = vpack.c.bf16 %v652, %v652
        %v751 = vpack.c.bf16 %v733, %v733
        %v752 = vpack.c.bf16 %v735, %v735
        %v769 = vunpack.c.l.b16 %v737
        %v770 = vunpack.c.l.b16 %v738
        %v771 = vunpack.c.l.b16 %v739
        %v772 = vunpack.c.l.b16 %v740
        %v773 = vunpack.c.l.b16 %v741
        %v774 = vunpack.c.l.b16 %v742
        %v775 = vunpack.c.l.b16 %v743
        %v776 = vunpack.c.l.b16 %v744
        %v777 = vunpack.c.h.b16 %v737
        %v778 = vunpack.c.h.b16 %v738
        %v779 = vunpack.c.h.b16 %v739
        %v780 = vunpack.c.h.b16 %v740
        %v781 = vunpack.c.h.b16 %v741
        %v782 = vunpack.c.h.b16 %v742
        %v783 = vunpack.c.h.b16 %v743
        %v784 = vunpack.c.h.b16 %v744
        %v785 = vunpack.c.l.b16 %v745
        %v786 = vunpack.c.l.b16 %v746
        %v787 = vunpack.c.l.b16 %v747
        %v788 = vunpack.c.l.b16 %v748
        %v789 = vunpack.c.l.b16 %v749
        %v790 = vunpack.c.l.b16 %v750
        %v791 = vunpack.c.l.b16 %v751
        %v792 = vunpack.c.l.b16 %v752
        %v793 = vpack.c.b16 %v770, %v769
        %v794 = vpack.c.b16 %v772, %v771
        %v795 = vpack.c.b16 %v774, %v773
        %v796 = vpack.c.b16 %v776, %v775
        %v797 = vpack.c.b16 %v778, %v777
        %v798 = vpack.c.b16 %v780, %v779
        %v799 = vpack.c.b16 %v782, %v781
        %v800 = vpack.c.b16 %v784, %v783
        %v801 = vpack.c.b16 %v786, %v785
        %v802 = vpack.c.b16 %v788, %v787
        %v803 = vpack.c.b16 %v790, %v789
        %v804 = vpack.c.b16 %v792, %v791
        %817 = vst [vmem:[%s347] sm:$0xff] %v793
        %818 = vst [vmem:[%s347 + $0x8] sm:$0xff] %v794
        %819 = vst [vmem:[%s347 + $0x10] sm:$0xff] %v795
        %820 = vst [vmem:[%s347 + $0x18] sm:$0xff] %v796
        %821 = vst [vmem:[%s347 + $0x20] sm:$0xff] %v797
        %822 = vst [vmem:[%s347 + $0x28] sm:$0xff] %v798
        %823 = vst [vmem:[%s347 + $0x30] sm:$0xff] %v799
        %824 = vst [vmem:[%s347 + $0x38] sm:$0xff] %v800
        %825 = vst [vmem:[%s347 + $0x40] sm:$0xff] %v801
        %826 = vst [vmem:[%s347 + $0x48] sm:$0xff] %v802
        %827 = vst [vmem:[%s347 + $0x50] sm:$0xff] %v803
        %828 = vst [vmem:[%s347 + $0x58] sm:$0xff] %v804
        %v829 = vxor.u32 %v472, 2147483648
        %v830 = vxor.u32 %v474, 2147483648
        %v831 = vxor.u32 %v555, 2147483648
        %v832 = vxor.u32 %v557, 2147483648
        %v833 = vxor.u32 %v638, 2147483648
        %v834 = vxor.u32 %v640, 2147483648
        %v835 = vxor.u32 %v721, 2147483648
        %v836 = vxor.u32 %v723, 2147483648
        %v837 = vxor.u32 %v478, 2147483648
        %v838 = vxor.u32 %v480, 2147483648
        %v839 = vxor.u32 %v561, 2147483648
        %v840 = vxor.u32 %v563, 2147483648
        %v841 = vxor.u32 %v644, 2147483648
        %v842 = vxor.u32 %v646, 2147483648
        %v843 = vxor.u32 %v727, 2147483648
        %v844 = vxor.u32 %v729, 2147483648
        %v845 = vxor.u32 %v484, 2147483648
        %v846 = vxor.u32 %v486, 2147483648
        %v847 = vxor.u32 %v567, 2147483648
        %v848 = vxor.u32 %v569, 2147483648
        %v849 = vxor.u32 %v650, 2147483648
        %v850 = vxor.u32 %v652, 2147483648
        %v851 = vxor.u32 %v733, 2147483648
        %v852 = vxor.u32 %v735, 2147483648
        %v853 = vmul.f32 %v829, 1.442695
        %v854 = vpow.pop %v853
        %v855 = vmul.f32 %v830, 1.442695
        %v856 = vpow.pop %v855
        %v857 = vmul.f32 %v831, 1.442695
        %v858 = vpow.pop %v857
        %v859 = vmul.f32 %v832, 1.442695
        %v860 = vpow.pop %v859
        %v861 = vmul.f32 %v833, 1.442695
        %v862 = vpow.pop %v861
        %v863 = vmul.f32 %v834, 1.442695
        %v864 = vpow.pop %v863
        %v865 = vmul.f32 %v835, 1.442695
        %v866 = vpow.pop %v865
        %v867 = vmul.f32 %v836, 1.442695
        %v868 = vpow.pop %v867
        %v869 = vmul.f32 %v837, 1.442695
        %v870 = vpow.pop %v869
        %v871 = vmul.f32 %v838, 1.442695
        %v872 = vpow.pop %v871
        %v873 = vmul.f32 %v839, 1.442695
        %v874 = vpow.pop %v873
        %v875 = vmul.f32 %v840, 1.442695
        %v876 = vpow.pop %v875
        %v877 = vmul.f32 %v841, 1.442695
        %v878 = vpow.pop %v877
        %v879 = vmul.f32 %v842, 1.442695
        %v880 = vpow.pop %v879
        %v881 = vmul.f32 %v843, 1.442695
        %v882 = vpow.pop %v881
        %v883 = vmul.f32 %v844, 1.442695
        %v884 = vpow.pop %v883
        %v885 = vmul.f32 %v845, 1.442695
        %v886 = vpow.pop %v885
        %v887 = vmul.f32 %v846, 1.442695
        %v888 = vpow.pop %v887
        %v889 = vmul.f32 %v847, 1.442695
        %v890 = vpow.pop %v889
        %v891 = vmul.f32 %v848, 1.442695
        %v892 = vpow.pop %v891
        %v893 = vmul.f32 %v849, 1.442695
        %v894 = vpow.pop %v893
        %v895 = vmul.f32 %v850, 1.442695
        %v896 = vpow.pop %v895
        %v897 = vmul.f32 %v851, 1.442695
        %v898 = vpow.pop %v897
        %v899 = vmul.f32 %v852, 1.442695
        %v900 = vpow.pop %v899
        %v901 = vadd.f32 %v854, 1.0
        %v902 = vadd.f32 %v856, 1.0
        %v903 = vadd.f32 %v858, 1.0
        %v904 = vadd.f32 %v860, 1.0
        %v905 = vadd.f32 %v862, 1.0
        %v906 = vadd.f32 %v864, 1.0
        %v907 = vadd.f32 %v866, 1.0
        %v908 = vadd.f32 %v868, 1.0
        %v909 = vadd.f32 %v870, 1.0
        %v910 = vadd.f32 %v872, 1.0
        %v911 = vadd.f32 %v874, 1.0
        %v912 = vadd.f32 %v876, 1.0
        %v913 = vadd.f32 %v878, 1.0
        %v914 = vadd.f32 %v880, 1.0
        %v915 = vadd.f32 %v882, 1.0
        %v916 = vadd.f32 %v884, 1.0
        %v917 = vadd.f32 %v886, 1.0
        %v918 = vadd.f32 %v888, 1.0
        %v919 = vadd.f32 %v890, 1.0
        %v920 = vadd.f32 %v892, 1.0
        %v921 = vadd.f32 %v894, 1.0
        %v922 = vadd.f32 %v896, 1.0
        %v923 = vadd.f32 %v898, 1.0
        %v924 = vadd.f32 %v900, 1.0
        %v925 = vrcp.pop %v901
        %v926 = vmul.f32 1.0, %v925
        %v927 = vrcp.pop %v902
        %v928 = vmul.f32 1.0, %v927
        %v929 = vrcp.pop %v903
        %v930 = vmul.f32 1.0, %v929
        %v931 = vrcp.pop %v904
        %v932 = vmul.f32 1.0, %v931
        %v933 = vrcp.pop %v905
        %v934 = vmul.f32 1.0, %v933
        %v935 = vrcp.pop %v906
        %v936 = vmul.f32 1.0, %v935
        %v937 = vrcp.pop %v907
        %v938 = vmul.f32 1.0, %v937
        %v939 = vrcp.pop %v908
        %v940 = vmul.f32 1.0, %v939
        %v941 = vrcp.pop %v909
        %v942 = vmul.f32 1.0, %v941
        %v943 = vrcp.pop %v910
        %v944 = vmul.f32 1.0, %v943
        %v945 = vrcp.pop %v911
        %v946 = vmul.f32 1.0, %v945
        %v947 = vrcp.pop %v912
        %v948 = vmul.f32 1.0, %v947
        %v949 = vrcp.pop %v913
        %v950 = vmul.f32 1.0, %v949
        %v951 = vrcp.pop %v914
        %v952 = vmul.f32 1.0, %v951
        %v953 = vrcp.pop %v915
        %v954 = vmul.f32 1.0, %v953
        %v955 = vrcp.pop %v916
        %v956 = vmul.f32 1.0, %v955
        %v957 = vrcp.pop %v917
        %v958 = vmul.f32 1.0, %v957
        %v959 = vrcp.pop %v918
        %v960 = vmul.f32 1.0, %v959
        %v961 = vrcp.pop %v919
        %v962 = vmul.f32 1.0, %v961
        %v963 = vrcp.pop %v920
        %v964 = vmul.f32 1.0, %v963
        %v965 = vrcp.pop %v921
        %v966 = vmul.f32 1.0, %v965
        %v967 = vrcp.pop %v922
        %v968 = vmul.f32 1.0, %v967
        %v969 = vrcp.pop %v923
        %v970 = vmul.f32 1.0, %v969
        %v971 = vrcp.pop %v924
        %v972 = vmul.f32 1.0, %v971
        %v973 = vlaneseq
        %v974 = vand.u32 %v973, 127
        %v975 = vadd.s32 %v974, 128
        %v976 = vadd.s32 %v974, 256
        %v977 = vadd.s32 %v974, 384
        %v978 = vadd.s32 %v974, 512
        %v979 = vadd.s32 %v974, 640
        %v980 = vadd.s32 %v974, 768
        %v981 = vadd.s32 %v974, 896
        %s982 = smul.u32 %s34, 1024
        %v983 = vstv %s982
        %v984 = vadd.s32 %v983, %v974
        %v985 = vadd.s32 %v983, %v975
        %v986 = vadd.s32 %v983, %v976
        %v987 = vadd.s32 %v983, %v977
        %v988 = vadd.s32 %v983, %v978
        %v989 = vadd.s32 %v983, %v979
        %v990 = vadd.s32 %v983, %v980
        %v991 = vadd.s32 %v983, %v981
        %v992 = vcvt.s32.f32 %v984
        %v993 = vcvt.s32.f32 %v985
        %v994 = vcvt.s32.f32 %v986
        %v995 = vcvt.s32.f32 %v987
        %v996 = vcvt.s32.f32 %v988
        %v997 = vcvt.s32.f32 %v989
        %v998 = vcvt.s32.f32 %v990
        %v999 = vcvt.s32.f32 %v991
        %v1000 = vadd.f32 %v992, 0.5
        %v1001 = vadd.f32 %v993, 0.5
        %v1002 = vadd.f32 %v994, 0.5
        %v1003 = vadd.f32 %v995, 0.5
        %v1004 = vadd.f32 %v996, 0.5
        %v1005 = vadd.f32 %v997, 0.5
        %v1006 = vadd.f32 %v998, 0.5
        %v1007 = vadd.f32 %v999, 0.5
        %v1008 = vmul.f32 %v1000, 0.03125
        %v1009 = vmul.f32 %v1001, 0.03125
        %v1010 = vmul.f32 %v1002, 0.03125
        %v1011 = vmul.f32 %v1003, 0.03125
        %v1012 = vmul.f32 %v1004, 0.03125
        %v1013 = vmul.f32 %v1005, 0.03125
        %v1014 = vmul.f32 %v1006, 0.03125
        %v1015 = vmul.f32 %v1007, 0.03125
        %v1016 = vfloor.f32 %v1008
        %v1017 = vfloor.f32 %v1009
        %v1018 = vfloor.f32 %v1010
        %v1019 = vfloor.f32 %v1011
        %v1020 = vfloor.f32 %v1012
        %v1021 = vfloor.f32 %v1013
        %v1022 = vfloor.f32 %v1014
        %v1023 = vfloor.f32 %v1015
        %v1024 = vmul.f32 %v1016, 32.0
        %v1025 = vmul.f32 %v1017, 32.0
        %v1026 = vmul.f32 %v1018, 32.0
        %v1027 = vmul.f32 %v1019, 32.0
        %v1028 = vmul.f32 %v1020, 32.0
        %v1029 = vmul.f32 %v1021, 32.0
        %v1030 = vmul.f32 %v1022, 32.0
        %v1031 = vmul.f32 %v1023, 32.0
        %v1032 = vsub.f32 %v992, %v1024
        %v1033 = vsub.f32 %v993, %v1025
        %v1034 = vsub.f32 %v994, %v1026
        %v1035 = vsub.f32 %v995, %v1027
        %v1036 = vsub.f32 %v996, %v1028
        %v1037 = vsub.f32 %v997, %v1029
        %v1038 = vsub.f32 %v998, %v1030
        %v1039 = vsub.f32 %v999, %v1031
        %v1040 = vld [vmem:[%s5] sm:$0xff]
        %v1041 = vld [vmem:[%s5 + $0x8] sm:$0xff]
        %v1042 = vld [vmem:[%s5 + $0x10] sm:$0xff]
        %v1043 = vsub.f32 %v1032, 0.5
        %v1044 = vsub.f32 %v1033, 0.5
        %v1045 = vsub.f32 %v1034, 0.5
        %v1046 = vsub.f32 %v1035, 0.5
        %v1047 = vsub.f32 %v1036, 0.5
        %v1048 = vsub.f32 %v1037, 0.5
        %v1049 = vsub.f32 %v1038, 0.5
        %v1050 = vsub.f32 %v1039, 0.5
        %v1051 = vmul.f32 %v1043, 8.0
        %v1052 = vmul.f32 %v1044, 8.0
        %v1053 = vmul.f32 %v1045, 8.0
        %v1054 = vmul.f32 %v1046, 8.0
        %v1055 = vmul.f32 %v1047, 8.0
        %v1056 = vmul.f32 %v1048, 8.0
        %v1057 = vmul.f32 %v1049, 8.0
        %v1058 = vmul.f32 %v1050, 8.0
        %1060 = vset.pattern.permute.xlu0 0
        %1061 = vperm.xlu0 %1060, %v1040
        %v1062 = vpop.permute.xlu0 %1061
        %1065 = vset.pattern.permute.xlu0 0
        %1066 = vperm.xlu0 %1065, %v1041
        %v1067 = vpop.permute.xlu0 %1066
        %1070 = vset.pattern.permute.xlu0 0
        %1071 = vperm.xlu0 %1070, %v1042
        %v1072 = vpop.permute.xlu0 %1071
        %v1074 = vmul.f32 %v1062, %v1051
        %v1075 = vmul.f32 %v1062, %v1052
        %v1076 = vmul.f32 %v1062, %v1053
        %v1077 = vmul.f32 %v1062, %v1054
        %v1078 = vmul.f32 %v1062, %v1055
        %v1079 = vmul.f32 %v1062, %v1056
        %v1080 = vmul.f32 %v1062, %v1057
        %v1081 = vmul.f32 %v1062, %v1058
        %v1082 = vmul.f32 %v1067, %v1051
        %v1083 = vmul.f32 %v1067, %v1052
        %v1084 = vmul.f32 %v1067, %v1053
        %v1085 = vmul.f32 %v1067, %v1054
        %v1086 = vmul.f32 %v1067, %v1055
        %v1087 = vmul.f32 %v1067, %v1056
        %v1088 = vmul.f32 %v1067, %v1057
        %v1089 = vmul.f32 %v1067, %v1058
        %v1090 = vmul.f32 %v1072, %v1051
        %v1091 = vmul.f32 %v1072, %v1052
        %v1092 = vmul.f32 %v1072, %v1053
        %v1093 = vmul.f32 %v1072, %v1054
        %v1094 = vmul.f32 %v1072, %v1055
        %v1095 = vmul.f32 %v1072, %v1056
        %v1096 = vmul.f32 %v1072, %v1057
        %v1097 = vmul.f32 %v1072, %v1058
        %v1098 = vld [vmem:[%s6] sm:$0xff]
        %v1099 = vld [vmem:[%s6 + $0x8] sm:$0xff]
        %v1100 = vld [vmem:[%s6 + $0x10] sm:$0xff]
        %v1101 = vsub.f32 %v1016, 0.5
        %v1102 = vsub.f32 %v1017, 0.5
        %v1103 = vsub.f32 %v1018, 0.5
        %v1104 = vsub.f32 %v1019, 0.5
        %v1105 = vsub.f32 %v1020, 0.5
        %v1106 = vsub.f32 %v1021, 0.5
        %v1107 = vsub.f32 %v1022, 0.5
        %v1108 = vsub.f32 %v1023, 0.5
        %v1109 = vmul.f32 %v1101, 8.0
        %v1110 = vmul.f32 %v1102, 8.0
        %v1111 = vmul.f32 %v1103, 8.0
        %v1112 = vmul.f32 %v1104, 8.0
        %v1113 = vmul.f32 %v1105, 8.0
        %v1114 = vmul.f32 %v1106, 8.0
        %v1115 = vmul.f32 %v1107, 8.0
        %v1116 = vmul.f32 %v1108, 8.0
        %1118 = vset.pattern.permute.xlu0 0
        %1119 = vperm.xlu0 %1118, %v1098
        %v1120 = vpop.permute.xlu0 %1119
        %1123 = vset.pattern.permute.xlu0 0
        %1124 = vperm.xlu0 %1123, %v1099
        %v1125 = vpop.permute.xlu0 %1124
        %1128 = vset.pattern.permute.xlu0 0
        %1129 = vperm.xlu0 %1128, %v1100
        %v1130 = vpop.permute.xlu0 %1129
        %v1132 = vmul.f32 %v1120, %v1109
        %v1133 = vmul.f32 %v1120, %v1110
        %v1134 = vmul.f32 %v1120, %v1111
        %v1135 = vmul.f32 %v1120, %v1112
        %v1136 = vmul.f32 %v1120, %v1113
        %v1137 = vmul.f32 %v1120, %v1114
        %v1138 = vmul.f32 %v1120, %v1115
        %v1139 = vmul.f32 %v1120, %v1116
        %v1140 = vmul.f32 %v1125, %v1109
        %v1141 = vmul.f32 %v1125, %v1110
        %v1142 = vmul.f32 %v1125, %v1111
        %v1143 = vmul.f32 %v1125, %v1112
        %v1144 = vmul.f32 %v1125, %v1113
        %v1145 = vmul.f32 %v1125, %v1114
        %v1146 = vmul.f32 %v1125, %v1115
        %v1147 = vmul.f32 %v1125, %v1116
        %v1148 = vmul.f32 %v1130, %v1109
        %v1149 = vmul.f32 %v1130, %v1110
        %v1150 = vmul.f32 %v1130, %v1111
        %v1151 = vmul.f32 %v1130, %v1112
        %v1152 = vmul.f32 %v1130, %v1113
        %v1153 = vmul.f32 %v1130, %v1114
        %v1154 = vmul.f32 %v1130, %v1115
        %v1155 = vmul.f32 %v1130, %v1116
        %v1156 = vadd.f32 %v1074, %v1132
        %v1157 = vadd.f32 %v1075, %v1133
        %v1158 = vadd.f32 %v1076, %v1134
        %v1159 = vadd.f32 %v1077, %v1135
        %v1160 = vadd.f32 %v1078, %v1136
        %v1161 = vadd.f32 %v1079, %v1137
        %v1162 = vadd.f32 %v1080, %v1138
        %v1163 = vadd.f32 %v1081, %v1139
        %v1164 = vadd.f32 %v1082, %v1140
        %v1165 = vadd.f32 %v1083, %v1141
        %v1166 = vadd.f32 %v1084, %v1142
        %v1167 = vadd.f32 %v1085, %v1143
        %v1168 = vadd.f32 %v1086, %v1144
        %v1169 = vadd.f32 %v1087, %v1145
        %v1170 = vadd.f32 %v1088, %v1146
        %v1171 = vadd.f32 %v1089, %v1147
        %v1172 = vadd.f32 %v1090, %v1148
        %v1173 = vadd.f32 %v1091, %v1149
        %v1174 = vadd.f32 %v1092, %v1150
        %v1175 = vadd.f32 %v1093, %v1151
        %v1176 = vadd.f32 %v1094, %v1152
        %v1177 = vadd.f32 %v1095, %v1153
        %v1178 = vadd.f32 %v1096, %v1154
        %v1179 = vadd.f32 %v1097, %v1155
        %v1180 = vld [vmem:[%s3] sm:$0xff]
        %v1181 = vld [vmem:[%s3 + $0x8] sm:$0xff]
        %v1182 = vld [vmem:[%s3 + $0x10] sm:$0xff]
        %v1183 = vld [vmem:[%s4] sm:$0xff]
        %v1184 = vld [vmem:[%s4 + $0x8] sm:$0xff]
        %v1185 = vld [vmem:[%s4 + $0x10] sm:$0xff]
        %1187 = vset.pattern.permute.xlu0 0
        %1188 = vperm.xlu0 %1187, %v1183
        %v1189 = vpop.permute.xlu0 %1188
        %1192 = vset.pattern.permute.xlu0 0
        %1193 = vperm.xlu0 %1192, %v1184
        %v1194 = vpop.permute.xlu0 %1193
        %1197 = vset.pattern.permute.xlu0 0
        %1198 = vperm.xlu0 %1197, %v1185
        %v1199 = vpop.permute.xlu0 %1198
        %v1201 = vmul.f32 %v1189, %v926
        %v1202 = vmul.f32 %v1189, %v928
        %v1203 = vmul.f32 %v1189, %v930
        %v1204 = vmul.f32 %v1189, %v932
        %v1205 = vmul.f32 %v1189, %v934
        %v1206 = vmul.f32 %v1189, %v936
        %v1207 = vmul.f32 %v1189, %v938
        %v1208 = vmul.f32 %v1189, %v940
        %v1209 = vmul.f32 %v1194, %v942
        %v1210 = vmul.f32 %v1194, %v944
        %v1211 = vmul.f32 %v1194, %v946
        %v1212 = vmul.f32 %v1194, %v948
        %v1213 = vmul.f32 %v1194, %v950
        %v1214 = vmul.f32 %v1194, %v952
        %v1215 = vmul.f32 %v1194, %v954
        %v1216 = vmul.f32 %v1194, %v956
        %v1217 = vmul.f32 %v1199, %v958
        %v1218 = vmul.f32 %v1199, %v960
        %v1219 = vmul.f32 %v1199, %v962
        %v1220 = vmul.f32 %v1199, %v964
        %v1221 = vmul.f32 %v1199, %v966
        %v1222 = vmul.f32 %v1199, %v968
        %v1223 = vmul.f32 %v1199, %v970
        %v1224 = vmul.f32 %v1199, %v972
        %1226 = vset.pattern.permute.xlu0 0
        %1227 = vperm.xlu0 %1226, %v1180
        %v1228 = vpop.permute.xlu0 %1227
        %1231 = vset.pattern.permute.xlu0 0
        %1232 = vperm.xlu0 %1231, %v1181
        %v1233 = vpop.permute.xlu0 %1232
        %1236 = vset.pattern.permute.xlu0 0
        %1237 = vperm.xlu0 %1236, %v1182
        %v1238 = vpop.permute.xlu0 %1237
        %v1240 = vadd.f32 %v1228, %v1201
        %v1241 = vadd.f32 %v1228, %v1202
        %v1242 = vadd.f32 %v1228, %v1203
        %v1243 = vadd.f32 %v1228, %v1204
        %v1244 = vadd.f32 %v1228, %v1205
        %v1245 = vadd.f32 %v1228, %v1206
        %v1246 = vadd.f32 %v1228, %v1207
        %v1247 = vadd.f32 %v1228, %v1208
        %v1248 = vadd.f32 %v1233, %v1209
        %v1249 = vadd.f32 %v1233, %v1210
        %v1250 = vadd.f32 %v1233, %v1211
        %v1251 = vadd.f32 %v1233, %v1212
        %v1252 = vadd.f32 %v1233, %v1213
        %v1253 = vadd.f32 %v1233, %v1214
        %v1254 = vadd.f32 %v1233, %v1215
        %v1255 = vadd.f32 %v1233, %v1216
        %v1256 = vadd.f32 %v1238, %v1217
        %v1257 = vadd.f32 %v1238, %v1218
        %v1258 = vadd.f32 %v1238, %v1219
        %v1259 = vadd.f32 %v1238, %v1220
        %v1260 = vadd.f32 %v1238, %v1221
        %v1261 = vadd.f32 %v1238, %v1222
        %v1262 = vadd.f32 %v1238, %v1223
        %v1263 = vadd.f32 %v1238, %v1224
        %v1264 = vmul.f32 %v926, %v1240
        %v1265 = vmul.f32 %v928, %v1241
        %v1266 = vmul.f32 %v930, %v1242
        %v1267 = vmul.f32 %v932, %v1243
        %v1268 = vmul.f32 %v934, %v1244
        %v1269 = vmul.f32 %v936, %v1245
        %v1270 = vmul.f32 %v938, %v1246
        %v1271 = vmul.f32 %v940, %v1247
        %v1272 = vmul.f32 %v942, %v1248
        %v1273 = vmul.f32 %v944, %v1249
        %v1274 = vmul.f32 %v946, %v1250
        %v1275 = vmul.f32 %v948, %v1251
        %v1276 = vmul.f32 %v950, %v1252
        %v1277 = vmul.f32 %v952, %v1253
        %v1278 = vmul.f32 %v954, %v1254
        %v1279 = vmul.f32 %v956, %v1255
        %v1280 = vmul.f32 %v958, %v1256
        %v1281 = vmul.f32 %v960, %v1257
        %v1282 = vmul.f32 %v962, %v1258
        %v1283 = vmul.f32 %v964, %v1259
        %v1284 = vmul.f32 %v966, %v1260
        %v1285 = vmul.f32 %v968, %v1261
        %v1286 = vmul.f32 %v970, %v1262
        %v1287 = vmul.f32 %v972, %v1263
        %v1288 = vadd.f32 %v1264, %v1156
        %v1289 = vadd.f32 %v1265, %v1157
        %v1290 = vadd.f32 %v1266, %v1158
        %v1291 = vadd.f32 %v1267, %v1159
        %v1292 = vadd.f32 %v1268, %v1160
        %v1293 = vadd.f32 %v1269, %v1161
        %v1294 = vadd.f32 %v1270, %v1162
        %v1295 = vadd.f32 %v1271, %v1163
        %v1296 = vadd.f32 %v1272, %v1164
        %v1297 = vadd.f32 %v1273, %v1165
        %v1298 = vadd.f32 %v1274, %v1166
        %v1299 = vadd.f32 %v1275, %v1167
        %v1300 = vadd.f32 %v1276, %v1168
        %v1301 = vadd.f32 %v1277, %v1169
        %v1302 = vadd.f32 %v1278, %v1170
        %v1303 = vadd.f32 %v1279, %v1171
        %v1304 = vadd.f32 %v1280, %v1172
        %v1305 = vadd.f32 %v1281, %v1173
        %v1306 = vadd.f32 %v1282, %v1174
        %v1307 = vadd.f32 %v1283, %v1175
        %v1308 = vadd.f32 %v1284, %v1176
        %v1309 = vadd.f32 %v1285, %v1177
        %v1310 = vadd.f32 %v1286, %v1178
        %v1311 = vadd.f32 %v1287, %v1179
        %1312 = vst [vmem:[%s354] sm:$0xff] %v1288
        %1313 = vst [vmem:[%s354 + $0x8] sm:$0xff] %v1289
        %1314 = vst [vmem:[%s354 + $0x10] sm:$0xff] %v1290
        %1315 = vst [vmem:[%s354 + $0x18] sm:$0xff] %v1291
        %1316 = vst [vmem:[%s354 + $0x20] sm:$0xff] %v1292
        %1317 = vst [vmem:[%s354 + $0x28] sm:$0xff] %v1293
        %1318 = vst [vmem:[%s354 + $0x30] sm:$0xff] %v1294
        %1319 = vst [vmem:[%s354 + $0x38] sm:$0xff] %v1295
        %1320 = vst [vmem:[%s354 + $0x40] sm:$0xff] %v1296
        %1321 = vst [vmem:[%s354 + $0x48] sm:$0xff] %v1297
        %1322 = vst [vmem:[%s354 + $0x50] sm:$0xff] %v1298
        %1323 = vst [vmem:[%s354 + $0x58] sm:$0xff] %v1299
        %1324 = vst [vmem:[%s354 + $0x60] sm:$0xff] %v1300
        %1325 = vst [vmem:[%s354 + $0x68] sm:$0xff] %v1301
        %1326 = vst [vmem:[%s354 + $0x70] sm:$0xff] %v1302
        %1327 = vst [vmem:[%s354 + $0x78] sm:$0xff] %v1303
        %1328 = vst [vmem:[%s354 + $0x80] sm:$0xff] %v1304
        %1329 = vst [vmem:[%s354 + $0x88] sm:$0xff] %v1305
        %1330 = vst [vmem:[%s354 + $0x90] sm:$0xff] %v1306
        %1331 = vst [vmem:[%s354 + $0x98] sm:$0xff] %v1307
        %1332 = vst [vmem:[%s354 + $0xa0] sm:$0xff] %v1308
        %1333 = vst [vmem:[%s354 + $0xa8] sm:$0xff] %v1309
        %1334 = vst [vmem:[%s354 + $0xb0] sm:$0xff] %v1310
        %1335 = vst [vmem:[%s354 + $0xb8] sm:$0xff] %v1311
        %s1336 = sand.u32 %s205, 1
        %s1337 = scalar_lea.sflag [#allocation4], %s1336
        %s1338 = sand.u32 %s205, 1
        %s1339 = smul.addr %s1338, 96
        %s1340 = scalar_lea.vmem [#allocation5], %s1339
        %s1341 = sand.u32 %s233, 1
        %s1342 = scalar_lea.sflag [#allocation7], %s1341
        %s1343 = sand.u32 %s233, 1
        %s1344 = smul.addr %s1343, 192
        %s1345 = scalar_lea.vmem [#allocation6], %s1344
        // Predicated region
        $region53: #{tpu_custom_call.1} parent=47 // pred_check
          %p1346 = pneg %p215
        $region54: #{tpu_custom_call.1} parent=47 // pred_check_branch
          %1348 = sbr.rel (%p1346) target = $region56
        $region55: #{tpu_custom_call.1} parent=47 // pred_region
          %s1349 = smul.u32 8, %s34
          %s1351 = ssub.s32 1536, 1536
          %1352 = vsyncadd %s1337, %s1351
          %s1353 = smul.addr %s33, 24
          %s1354 = sadd.s32 %s1349, %s1353
          %s1355 = smul.addr %s1354, 64
          %s1356 = scalar_lea.hbm %s7, %s1355
          %s1357 = sshll.u32 %s1340, 4
          %s1358 = int_to_ptr.vmem [resolvable:$true] %s1357
          %1363 = dma.vmem_to_hbm [thread:$0]  %s1358, 1536, %s1356, %s1337, 512, 512, 32
        $region56: #{tpu_custom_call.1} parent=47 // pred_fallthru
          _
        // Predicated region
        $region57: #{tpu_custom_call.1} parent=47 // pred_check
          %p1364 = pneg %p243
        $region58: #{tpu_custom_call.1} parent=47 // pred_check_branch
          %1366 = sbr.rel (%p1364) target = $region60
        $region59: #{tpu_custom_call.1} parent=47 // pred_region
          %s1367 = smul.u32 8, %s34
          %s1369 = ssub.s32 3072, 3072
          %1370 = vsyncadd %s1342, %s1369
          %s1371 = smul.addr %s33, 24
          %s1372 = sadd.s32 %s1367, %s1371
          %s1373 = smul.addr %s1372, 128
          %s1374 = scalar_lea.hbm %s8, %s1373
          %s1375 = sshll.u32 %s1345, 4
          %s1376 = int_to_ptr.vmem [resolvable:$true] %s1375
          %1381 = dma.vmem_to_hbm [thread:$0]  %s1376, 3072, %s1374, %s1342, 1024, 1024, 64
        $region60: #{tpu_custom_call.1} parent=47 // pred_fallthru
          _
      $region48: #{tpu_custom_call.1} parent=5 // pred_fallthru
        _
      %p1382 = scmp.le.s32.totalorder 2, %s24
      // Predicated region
      $region61: #{tpu_custom_call.1} parent=5 // pred_check
        %p1383 = pneg %p1382
      $region62: #{tpu_custom_call.1} parent=5 // pred_check_branch
        %1385 = sbr.rel (%p1383) target = $region64
      $region63: #{tpu_custom_call.1} parent=5 // pred_region
        %s1386 = ssub.s32 %s24, 2
        // Predicated region
        $region65: #{tpu_custom_call.1} parent=63 // pred_check
          %p1387 = pneg %p221
        $region66: #{tpu_custom_call.1} parent=63 // pred_check_branch
          %1389 = sbr.rel (%p1387) target = $region68
        $region67: #{tpu_custom_call.1} parent=63 // pred_region
          %s1390 = sand.u32 %s206, 1
          %s1391 = scalar_lea.sflag [#allocation4], %s1390
          %s1392 = sand.u32 %s206, 1
          %s1393 = smul.addr %s1392, 96
          %s1394 = scalar_lea.vmem [#allocation5], %s1393
          %1395 = dma.done %s1391, 1536
        $region68: #{tpu_custom_call.1} parent=63 // pred_fallthru
          _
        // Predicated region
        $region69: #{tpu_custom_call.1} parent=63 // pred_check
          %p1396 = pneg %p249
        $region70: #{tpu_custom_call.1} parent=63 // pred_check_branch
          %1398 = sbr.rel (%p1396) target = $region72
        $region71: #{tpu_custom_call.1} parent=63 // pred_region
          %s1399 = sand.u32 %s234, 1
          %s1400 = scalar_lea.sflag [#allocation7], %s1399
          %s1401 = sand.u32 %s234, 1
          %s1402 = smul.addr %s1401, 192
          %s1403 = scalar_lea.vmem [#allocation6], %s1402
          %1404 = dma.done %s1400, 3072
        $region72: #{tpu_custom_call.1} parent=63 // pred_fallthru
          _
      $region64: #{tpu_custom_call.1} parent=5 // pred_fallthru
        _
    $region6: #{tpu_custom_call.1} parent=1 // loop_footer
      %s28 = sadd.s32 1, %s24
    $region7: #{tpu_custom_call.1} parent=1 // loop_footer_branch
      %23 = sbr.rel target = $region3
    $region8: #{tpu_custom_call.1} parent=1 // loop_exit
      _
    %1405 = vsyncpa [#allocation3], 1
    %s1406 = scalar_lea.sflag [#allocation3], 1
    %1407 = vsyncpa %s1406, 1
    %1408 = vsyncpa [#allocation4], 1
    %s1409 = scalar_lea.sflag [#allocation4], 1
    %1410 = vsyncpa %s1409, 1
    %1411 = vsyncpa [#allocation7], 1
    %s1412 = scalar_lea.sflag [#allocation7], 1
    %1413 = vsyncpa %s1412, 1

</llo_original>
